<compile_context>
chip_gen: v7x
topology: tpu7x:2x2x1
jax: 0.10.0
libtpu: 0.0.40
codegen_flags: <defaults>
</compile_context>

<pallas_src>
import functools

import jax
import jax.numpy as jnp
from jax.experimental import pallas as pl
from jax.experimental.pallas import tpu as pltpu


def _layernorm(v, g, b, eps=1e-5):
    """f32 LayerNorm over the last dim (matches nn.LayerNorm, eps=1e-5)."""
    mu = jnp.mean(v, axis=-1, keepdims=True)
    var = jnp.mean((v - mu) ** 2, axis=-1, keepdims=True)
    return (v - mu) * jax.lax.rsqrt(var + eps) * g + b


def encoder_kernel(x_ref,
                   ln1_g, ln1_b, wq_ref, bq_ref, wkv_ref, bkv_ref,
                   wo_ref, bo_ref,
                   ln2_g, ln2_b, w1_ref, b1_ref, w2_ref, b2_ref,
                   o_ref,
                   xn_scratch, kv_scratch, attn_scratch,
                   *, num_heads):
    L, D = x_ref.shape
    TQ = o_ref.shape[0]
    dk = D // num_heads
    inv_scale = jnp.float32(1.0 / (float(dk) ** 0.5))
    qi = pl.program_id(1)

    # ---- Once per batch element (qi axis is "arbitrary"): full-sequence
    #      LayerNorm and K/V projection into persistent VMEM scratch. ----
    @pl.when(qi == 0)
    def _():
        xn = _layernorm(x_ref[...], ln1_g[...], ln1_b[...])      # f32 stats
        xn_bf = xn.astype(jnp.bfloat16)
        xn_scratch[...] = xn_bf
        kv = jnp.dot(xn_bf, wkv_ref[...],
                     preferred_element_type=jnp.float32) + bkv_ref[...]
        kv_scratch[...] = kv.astype(jnp.bfloat16)                # K | V

    # ---- MHA branch for this query tile ----
    row0 = pl.multiple_of(qi * TQ, TQ)
    x_q = x_ref[pl.ds(row0, TQ), :]                 # (TQ, D) f32 residual
    xn_q = xn_scratch[pl.ds(row0, TQ), :]           # (TQ, D) bf16 (no re-LN)

    q = jnp.dot(xn_q, wq_ref[...],
                preferred_element_type=jnp.float32) + bq_ref[...]
    q_bf = (q * inv_scale).astype(jnp.bfloat16)      # fold 1/sqrt(dk) once

    # Per-head attention.  Each head's output is stored into its column slice
    # of attn_scratch (bf16), which also bounds the head's (TQ, L) f32
    # temporaries before the next head starts.
    for h in range(num_heads):
        c0, c1 = h * dk, (h + 1) * dk
        kh = kv_scratch[:, c0:c1]                   # (L, dk) bf16
        vh = kv_scratch[:, D + c0:D + c1]           # (L, dk) bf16
        s = jax.lax.dot_general(
            q_bf[:, c0:c1], kh,
            dimension_numbers=(((1,), (1,)), ((), ())),
            preferred_element_type=jnp.float32)      # (TQ, L) f32
        s = s - jnp.max(s, axis=-1, keepdims=True)
        e = jnp.exp(s)
        p = e * pl.reciprocal(jnp.sum(e, axis=-1, keepdims=True), approx=True)
        oh = jnp.dot(p.astype(jnp.bfloat16), vh,
                     preferred_element_type=jnp.float32)          # (TQ, dk)
        attn_scratch[:, c0:c1] = oh.astype(jnp.bfloat16)

    # Single full-depth output projection (one MXU pass, f32 accumulation).
    mha = jnp.dot(attn_scratch[...], wo_ref[...],
                  preferred_element_type=jnp.float32) + bo_ref[...]
    x1 = x_q + mha

    # ---- FFN branch (pre-norm) ----
    xn2 = _layernorm(x1, ln2_g[...], ln2_b[...]).astype(jnp.bfloat16)
    hdn = jnp.dot(xn2, w1_ref[...],
                  preferred_element_type=jnp.float32) + b1_ref[...]
    hdn = jnp.maximum(hdn, 0.0).astype(jnp.bfloat16)
    ffn = jnp.dot(hdn, w2_ref[...],
                  preferred_element_type=jnp.float32) + b2_ref[...]

    o_ref[...] = (x1 + ffn).astype(o_ref.dtype)


def _vmem_capacity_bytes():
    try:
        return int(pltpu.get_tpu_info().vmem_capacity_bytes)
    except Exception:
        return 64 * 1024 * 1024  # conservative (v7x-sized) fallback


def _pick_q_tile(L, vmem_capacity):
    # Prefer smaller query tiles on 64-MiB-VMEM parts (v7x); larger elsewhere.
    prefs = (256, 128, 512) if vmem_capacity <= 64 * 1024 * 1024 else (512, 256, 128)
    for t in prefs:
        if L % t == 0 and t < L:
            return t
    return L


def transformer_encoder_block(x, params, num_heads):
    B, L, D = x.shape
    vmem_cap = _vmem_capacity_bytes()
    TQ = _pick_q_tile(L, vmem_cap)
    n_q = L // TQ
    # ~85% of physical VMEM (headroom for Pallas-internal scratch), <= 112 MiB.
    vmem_limit = max(min(int(vmem_cap * 0.85), 112 * 1024 * 1024),
                     32 * 1024 * 1024)

    # Matmul weights in bf16 (halves resident VMEM / HBM DMA, feeds the MXU at
    # its bf16 rate); biases and LayerNorm params stay f32.
    weights = [
        params["ln1_g"].astype(jnp.float32), params["ln1_b"].astype(jnp.float32),
        params["wq"].astype(jnp.bfloat16),   params["bq"].astype(jnp.float32),
        params["wkv"].astype(jnp.bfloat16),  params["bkv"].astype(jnp.float32),
        params["wo"].astype(jnp.bfloat16),   params["bo"].astype(jnp.float32),
        params["ln2_g"].astype(jnp.float32), params["ln2_b"].astype(jnp.float32),
        params["w1"].astype(jnp.bfloat16),   params["b1"].astype(jnp.float32),
        params["w2"].astype(jnp.bfloat16),   params["b2"].astype(jnp.float32),
    ]

    def _weight_spec(arr):
        nd = arr.ndim
        idx = lambda b, qi, _nd=nd: (0,) * _nd
        try:
            # Constant block index -> double buffering buys nothing; single-
            # buffer the resident weights to halve their VMEM footprint.
            return pl.BlockSpec(arr.shape, idx, pipeline_mode=pl.Buffered(1))
        except TypeError:  # older jax without pipeline_mode
            return pl.BlockSpec(arr.shape, idx)

    # Full (L, D) slab per batch element; block index is constant across the
    # query-tile axis so it is not re-DMA'd between q tiles.
    x_spec = pl.BlockSpec((pl.Squeezed(), L, D), lambda b, qi: (b, 0, 0))
    in_specs = [x_spec] + [_weight_spec(w) for w in weights]
    out_spec = pl.BlockSpec((pl.Squeezed(), TQ, D), lambda b, qi: (b, qi, 0))

    scratch_shapes = [
        pltpu.VMEM((L, D), jnp.bfloat16),        # LayerNorm(x), reused per tile
        pltpu.VMEM((L, 2 * D), jnp.bfloat16),    # K | V projection, per batch elt
        pltpu.VMEM((TQ, D), jnp.bfloat16),       # concatenated head outputs
    ]

    kernel = functools.partial(encoder_kernel, num_heads=num_heads)

    return pl.pallas_call(
        kernel,
        out_shape=jax.ShapeDtypeStruct((B, L, D), jnp.float32),
        grid=(B, n_q),
        in_specs=in_specs,
        out_specs=out_spec,
        scratch_shapes=scratch_shapes,
        compiler_params=pltpu.CompilerParams(
            dimension_semantics=("parallel", "arbitrary"),
            vmem_limit_bytes=vmem_limit),
    )(x, *weights)


def _reference(x, params, num_heads):
    """Pure-JAX f32 reference mirroring the PyTorch forward (dropout = identity)."""
    B, L, D = x.shape
    dk = D // num_heads
    scale = jnp.sqrt(jnp.float32(dk))

    def ln(v, g, b):
        mu = jnp.mean(v, axis=-1, keepdims=True)
        var = jnp.mean((v - mu) ** 2, axis=-1, keepdims=True)
        return (v - mu) / jnp.sqrt(var + 1e-5) * g + b

    xn = ln(x, params["ln1_g"], params["ln1_b"])
    q = xn @ params["wq"] + params["bq"]
    kv = xn @ params["wkv"] + params["bkv"]
    k, v = kv[..., :D], kv[..., D:]

    def split_heads(t):  # (B, L, D) -> (B, H, L, dk)
        return t.reshape(B, L, num_heads, dk).transpose(0, 2, 1, 3)

    Q, K, V = split_heads(q), split_heads(k), split_heads(v)
    s = jnp.einsum("bhqd,bhkd->bhqk", Q, K) / scale
    a = jax.nn.softmax(s, axis=-1)
    o = jnp.einsum("bhqk,bhkd->bhqd", a, V)
    o = o.transpose(0, 2, 1, 3).reshape(B, L, D)
    mha_out = o @ params["wo"] + params["bo"]
    x1 = x + mha_out

    xn2 = ln(x1, params["ln2_g"], params["ln2_b"])
    h = jax.nn.relu(xn2 @ params["w1"] + params["b1"])
    ffn = h @ params["w2"] + params["b2"]
    return x1 + ffn


def _init_params(key, d_model, num_heads):
    D = d_model
    ks = jax.random.split(key, 8)
    s = 0.02
    return {
        "ln1_g": jnp.ones((1, D), jnp.float32),
        "ln1_b": jnp.zeros((1, D), jnp.float32),
        "wq": s * jax.random.normal(ks[0], (D, D), jnp.float32),
        "bq": s * jax.random.normal(ks[1], (1, D), jnp.float32),
        "wkv": s * jax.random.normal(ks[2], (D, 2 * D), jnp.float32),
        "bkv": s * jax.random.normal(ks[3], (1, 2 * D), jnp.float32),
        "wo": s * jax.random.normal(ks[4], (D, D), jnp.float32),
        "bo": jnp.zeros((1, D), jnp.float32),
        "ln2_g": jnp.ones((1, D), jnp.float32),
        "ln2_b": jnp.zeros((1, D), jnp.float32),
        "w1": s * jax.random.normal(ks[5], (D, 4 * D), jnp.float32),
        "b1": s * jax.random.normal(ks[6], (1, 4 * D), jnp.float32),
        "w2": s * jax.random.normal(ks[7], (4 * D, D), jnp.float32),
        "b2": jnp.zeros((1, D), jnp.float32),
    }


def _run_case(key, B, L, D, H):
    kx, kp = jax.random.split(key)
    x = jax.random.normal(kx, (B, L, D), jnp.float32)
    params = _init_params(kp, D, H)

    out = transformer_encoder_block(x, params, num_heads=H)
    out = jax.block_until_ready(out)

    ref = _reference(x, params, H)
    assert out.shape == (B, L, D)
    assert bool(jnp.all(jnp.isfinite(out)))
    # bf16 MXU inputs with f32 accumulation; LayerNorm/softmax kept in f32.
    assert bool(jnp.allclose(out, ref, atol=5e-3, rtol=5e-3)), \
        f"mismatch vs reference at B={B}, L={L}, D={D}, H={H}"


if __name__ == "__main__":
    key = jax.random.PRNGKey(0)
    k1, k2 = jax.random.split(key)

    # Small smoke test (single query tile).
    _run_case(k1, B=2, L=8, D=32, H=4)
    # Covers the multi-query-tile path (persistent K/V scratch, qi sweep).
    _run_case(k2, B=2, L=256, D=128, H=4)

    print("KERNEL_OK")
</pallas_src>

<mosaic_0001>
module attributes {stable_mosaic.version = 11 : i64} {
  func.func @encoder_kernel(%arg0: i32, %arg1: i32, %arg2: memref<1x8x32xf32, #tpu.memory_space<vmem>>, %arg3: memref<1x32xf32, #tpu.memory_space<vmem>>, %arg4: memref<1x32xf32, #tpu.memory_space<vmem>>, %arg5: memref<32x32xbf16, #tpu.memory_space<vmem>>, %arg6: memref<1x32xf32, #tpu.memory_space<vmem>>, %arg7: memref<32x64xbf16, #tpu.memory_space<vmem>>, %arg8: memref<1x64xf32, #tpu.memory_space<vmem>>, %arg9: memref<32x32xbf16, #tpu.memory_space<vmem>>, %arg10: memref<1x32xf32, #tpu.memory_space<vmem>>, %arg11: memref<1x32xf32, #tpu.memory_space<vmem>>, %arg12: memref<1x32xf32, #tpu.memory_space<vmem>>, %arg13: memref<32x128xbf16, #tpu.memory_space<vmem>>, %arg14: memref<1x128xf32, #tpu.memory_space<vmem>>, %arg15: memref<128x32xbf16, #tpu.memory_space<vmem>>, %arg16: memref<1x32xf32, #tpu.memory_space<vmem>>, %arg17: memref<1x8x32xf32, #tpu.memory_space<vmem>>, %arg18: memref<8x32xbf16, #tpu.memory_space<vmem>>, %arg19: memref<8x64xbf16, #tpu.memory_space<vmem>>, %arg20: memref<8x32xbf16, #tpu.memory_space<vmem>>) attributes {dimension_semantics = [#tpu.dimension_semantics<parallel>, #tpu.dimension_semantics<arbitrary>], iteration_bounds = array<i64: 2, 1>, scalar_prefetch = 0 : i64, scratch_operands = 3 : i64, tpu.core_type = #tpu.core_type<tc>, window_params = [{transform_indices = @transform_0, window_bounds = array<i64: 1, 8, 32>}, {pipeline_mode = #tpu.pipeline_mode<synchronous>, transform_indices = @transform_1, window_bounds = array<i64: 1, 32>}, {pipeline_mode = #tpu.pipeline_mode<synchronous>, transform_indices = @transform_2, window_bounds = array<i64: 1, 32>}, {pipeline_mode = #tpu.pipeline_mode<synchronous>, transform_indices = @transform_3, window_bounds = array<i64: 32, 32>}, {pipeline_mode = #tpu.pipeline_mode<synchronous>, transform_indices = @transform_4, window_bounds = array<i64: 1, 32>}, {pipeline_mode = #tpu.pipeline_mode<synchronous>, transform_indices = @transform_5, window_bounds = array<i64: 32, 64>}, {pipeline_mode = #tpu.pipeline_mode<synchronous>, transform_indices = @transform_6, window_bounds = array<i64: 1, 64>}, {pipeline_mode = #tpu.pipeline_mode<synchronous>, transform_indices = @transform_7, window_bounds = array<i64: 32, 32>}, {pipeline_mode = #tpu.pipeline_mode<synchronous>, transform_indices = @transform_8, window_bounds = array<i64: 1, 32>}, {pipeline_mode = #tpu.pipeline_mode<synchronous>, transform_indices = @transform_9, window_bounds = array<i64: 1, 32>}, {pipeline_mode = #tpu.pipeline_mode<synchronous>, transform_indices = @transform_10, window_bounds = array<i64: 1, 32>}, {pipeline_mode = #tpu.pipeline_mode<synchronous>, transform_indices = @transform_11, window_bounds = array<i64: 32, 128>}, {pipeline_mode = #tpu.pipeline_mode<synchronous>, transform_indices = @transform_12, window_bounds = array<i64: 1, 128>}, {pipeline_mode = #tpu.pipeline_mode<synchronous>, transform_indices = @transform_13, window_bounds = array<i64: 128, 32>}, {pipeline_mode = #tpu.pipeline_mode<synchronous>, transform_indices = @transform_14, window_bounds = array<i64: 1, 32>}, {transform_indices = @transform_15, window_bounds = array<i64: 1, 8, 32>}]} {
    %c0_i32 = arith.constant 0 : i32
    %0 = arith.cmpi eq, %arg1, %c0_i32 : i32
    %1 = arith.extui %0 : i1 to i32
    %c0_i32_0 = arith.constant 0 : i32
    %2 = arith.cmpi ne, %1, %c0_i32_0 : i32
    scf.if %2 {
      %c0_71 = arith.constant 0 : index
      %c0_72 = arith.constant 0 : index
      %c0_73 = arith.constant 0 : index
      %139 = vector.load %arg2[%c0_71, %c0_72, %c0_73] : memref<1x8x32xf32, #tpu.memory_space<vmem>>, vector<1x8x32xf32>
      %140 = vector.shape_cast %139 : vector<1x8x32xf32> to vector<8x32xf32>
      %c0_74 = arith.constant 0 : index
      %c0_75 = arith.constant 0 : index
      %141 = vector.load %arg3[%c0_74, %c0_75] : memref<1x32xf32, #tpu.memory_space<vmem>>, vector<1x32xf32>
      %c0_76 = arith.constant 0 : index
      %c0_77 = arith.constant 0 : index
      %142 = vector.load %arg4[%c0_76, %c0_77] : memref<1x32xf32, #tpu.memory_space<vmem>>, vector<1x32xf32>
      %cst_78 = arith.constant dense<0.000000e+00> : vector<8xf32>
      %143 = vector.multi_reduction <add>, %140, %cst_78 [1] : vector<8x32xf32> to vector<8xf32>
      %144 = vector.shape_cast %143 : vector<8xf32> to vector<8x1xf32>
      %cst_79 = arith.constant 3.200000e+01 : f32
      %145 = vector.broadcast %cst_79 : f32 to vector<8x1xf32>
      %146 = arith.divf %144, %145 : vector<8x1xf32>
      %147 = vector.broadcast %146 : vector<8x1xf32> to vector<8x32xf32>
      %148 = arith.subf %140, %147 : vector<8x32xf32>
      %149 = arith.mulf %148, %148 : vector<8x32xf32>
      %cst_80 = arith.constant dense<0.000000e+00> : vector<8xf32>
      %150 = vector.multi_reduction <add>, %149, %cst_80 [1] : vector<8x32xf32> to vector<8xf32>
      %151 = vector.shape_cast %150 : vector<8xf32> to vector<8x1xf32>
      %cst_81 = arith.constant 3.200000e+01 : f32
      %152 = vector.broadcast %cst_81 : f32 to vector<8x1xf32>
      %153 = arith.divf %151, %152 : vector<8x1xf32>
      %154 = vector.broadcast %146 : vector<8x1xf32> to vector<8x32xf32>
      %155 = arith.subf %140, %154 : vector<8x32xf32>
      %cst_82 = arith.constant 9.99999974E-6 : f32
      %156 = vector.broadcast %cst_82 : f32 to vector<8x1xf32>
      %157 = arith.addf %153, %156 : vector<8x1xf32>
      %158 = math.rsqrt %157 : vector<8x1xf32>
      %159 = vector.broadcast %158 : vector<8x1xf32> to vector<8x32xf32>
      %160 = arith.mulf %155, %159 : vector<8x32xf32>
      %161 = vector.broadcast %141 : vector<1x32xf32> to vector<8x32xf32>
      %162 = arith.mulf %160, %161 : vector<8x32xf32>
      %163 = vector.broadcast %142 : vector<1x32xf32> to vector<8x32xf32>
      %164 = arith.addf %162, %163 : vector<8x32xf32>
      %165 = arith.truncf %164 : vector<8x32xf32> to vector<8x32xbf16>
      %c0_83 = arith.constant 0 : index
      %c0_84 = arith.constant 0 : index
      %166 = vector.load %arg18[%c0_83, %c0_84] : memref<8x32xbf16, #tpu.memory_space<vmem>>, vector<8x32xbf16>
      tpu.vector_store %arg18[%c0_83, %c0_84], %165 {strides = array<i32>} : memref<8x32xbf16, #tpu.memory_space<vmem>>, vector<8x32xbf16>,
      %c0_85 = arith.constant 0 : index
      %c0_86 = arith.constant 0 : index
      %167 = vector.load %arg7[%c0_85, %c0_86] : memref<32x64xbf16, #tpu.memory_space<vmem>>, vector<32x64xbf16>
      %cst_87 = arith.constant dense<0.000000e+00> : vector<8x64xf32>
      %168 = tpu.matmul %165, %167, %cst_87 {dimension_numbers = #tpu.dot_dimension_numbers<[1], [0], [0], [1], [0, 0, 1, 1], [], []>} : vector<8x32xbf16>, vector<32x64xbf16>, vector<8x64xf32> -> vector<8x64xf32>
      %c0_88 = arith.constant 0 : index
      %c0_89 = arith.constant 0 : index
      %169 = vector.load %arg8[%c0_88, %c0_89] : memref<1x64xf32, #tpu.memory_space<vmem>>, vector<1x64xf32>
      %170 = vector.broadcast %169 : vector<1x64xf32> to vector<8x64xf32>
      %171 = arith.addf %168, %170 : vector<8x64xf32>
      %172 = arith.truncf %171 : vector<8x64xf32> to vector<8x64xbf16>
      %c0_90 = arith.constant 0 : index
      %c0_91 = arith.constant 0 : index
      %173 = vector.load %arg19[%c0_90, %c0_91] : memref<8x64xbf16, #tpu.memory_space<vmem>>, vector<8x64xbf16>
      tpu.vector_store %arg19[%c0_90, %c0_91], %172 {strides = array<i32>} : memref<8x64xbf16, #tpu.memory_space<vmem>>, vector<8x64xbf16>,
    } else {
    }
    %c8_i32 = arith.constant 8 : i32
    %3 = arith.muli %arg1, %c8_i32 : i32
    %4 = tpu.assume_multiple %3, 8 : i32
    %c0 = arith.constant 0 : index
    %5 = arith.index_cast %4 : i32 to index
    %c0_1 = arith.constant 0 : index
    %6 = vector.load %arg2[%c0, %5, %c0_1] : memref<1x8x32xf32, #tpu.memory_space<vmem>>, vector<1x8x32xf32>
    %7 = vector.shape_cast %6 : vector<1x8x32xf32> to vector<8x32xf32>
    %8 = arith.index_cast %4 : i32 to index
    %c0_2 = arith.constant 0 : index
    %9 = vector.load %arg18[%8, %c0_2] : memref<8x32xbf16, #tpu.memory_space<vmem>>, vector<8x32xbf16>
    %c0_3 = arith.constant 0 : index
    %c0_4 = arith.constant 0 : index
    %10 = vector.load %arg5[%c0_3, %c0_4] : memref<32x32xbf16, #tpu.memory_space<vmem>>, vector<32x32xbf16>
    %cst = arith.constant dense<0.000000e+00> : vector<8x32xf32>
    %11 = tpu.matmul %9, %10, %cst {dimension_numbers = #tpu.dot_dimension_numbers<[1], [0], [0], [1], [0, 0, 1, 1], [], []>} : vector<8x32xbf16>, vector<32x32xbf16>, vector<8x32xf32> -> vector<8x32xf32>
    %c0_5 = arith.constant 0 : index
    %c0_6 = arith.constant 0 : index
    %12 = vector.load %arg6[%c0_5, %c0_6] : memref<1x32xf32, #tpu.memory_space<vmem>>, vector<1x32xf32>
    %13 = vector.broadcast %12 : vector<1x32xf32> to vector<8x32xf32>
    %14 = arith.addf %11, %13 : vector<8x32xf32>
    %cst_7 = arith.constant 0.353553385 : f32
    %15 = vector.broadcast %cst_7 : f32 to vector<8x32xf32>
    %16 = arith.mulf %14, %15 : vector<8x32xf32>
    %17 = arith.truncf %16 : vector<8x32xf32> to vector<8x32xbf16>
    %c0_8 = arith.constant 0 : index
    %c0_9 = arith.constant 0 : index
    %18 = vector.load %arg19[%c0_8, %c0_9] : memref<8x64xbf16, #tpu.memory_space<vmem>>, vector<8x8xbf16>
    %c0_10 = arith.constant 0 : index
    %c32 = arith.constant 32 : index
    %19 = vector.load %arg19[%c0_10, %c32] : memref<8x64xbf16, #tpu.memory_space<vmem>>, vector<8x8xbf16>
    %20 = vector.extract_strided_slice %17 {offsets = [0, 0], sizes = [8, 8], strides = [1, 1]} : vector<8x32xbf16> to vector<8x8xbf16>
    %cst_11 = arith.constant dense<0.000000e+00> : vector<8x8xf32>
    %21 = tpu.matmul %20, %18, %cst_11 {dimension_numbers = #tpu.dot_dimension_numbers<[1], [1], [0], [0], [0, 0, 1, 0], [], []>} : vector<8x8xbf16>, vector<8x8xbf16>, vector<8x8xf32> -> vector<8x8xf32>
    %cst_12 = arith.constant dense<0xFF800000> : vector<8xf32>
    %22 = vector.multi_reduction <maximumf>, %21, %cst_12 [1] : vector<8x8xf32> to vector<8xf32>
    %23 = vector.shape_cast %22 : vector<8xf32> to vector<8x1xf32>
    %24 = vector.broadcast %23 : vector<8x1xf32> to vector<8x8xf32>
    %25 = arith.subf %21, %24 : vector<8x8xf32>
    %26 = math.exp %25 : vector<8x8xf32>
    %cst_13 = arith.constant dense<0.000000e+00> : vector<8xf32>
    %27 = vector.multi_reduction <add>, %26, %cst_13 [1] : vector<8x8xf32> to vector<8xf32>
    %28 = vector.shape_cast %27 : vector<8xf32> to vector<8x1xf32>
    %29 = tpu.reciprocal %28 {approx = true} : vector<8x1xf32> -> vector<8x1xf32>
    %30 = vector.broadcast %29 : vector<8x1xf32> to vector<8x8xf32>
    %31 = arith.mulf %26, %30 : vector<8x8xf32>
    %32 = arith.truncf %31 : vector<8x8xf32> to vector<8x8xbf16>
    %cst_14 = arith.constant dense<0.000000e+00> : vector<8x8xf32>
    %33 = tpu.matmul %32, %19, %cst_14 {dimension_numbers = #tpu.dot_dimension_numbers<[1], [0], [0], [1], [0, 0, 1, 1], [], []>} : vector<8x8xbf16>, vector<8x8xbf16>, vector<8x8xf32> -> vector<8x8xf32>
    %34 = arith.truncf %33 : vector<8x8xf32> to vector<8x8xbf16>
    %c0_15 = arith.constant 0 : index
    %c0_16 = arith.constant 0 : index
    %35 = vector.load %arg20[%c0_15, %c0_16] : memref<8x32xbf16, #tpu.memory_space<vmem>>, vector<8x8xbf16>
    tpu.vector_store %arg20[%c0_15, %c0_16], %34 {strides = array<i32>} : memref<8x32xbf16, #tpu.memory_space<vmem>>, vector<8x8xbf16>,
    %c0_17 = arith.constant 0 : index
    %c8 = arith.constant 8 : index
    %36 = vector.load %arg19[%c0_17, %c8] : memref<8x64xbf16, #tpu.memory_space<vmem>>, vector<8x8xbf16>
    %c0_18 = arith.constant 0 : index
    %c40 = arith.constant 40 : index
    %37 = vector.load %arg19[%c0_18, %c40] : memref<8x64xbf16, #tpu.memory_space<vmem>>, vector<8x8xbf16>
    %38 = vector.extract_strided_slice %17 {offsets = [0, 8], sizes = [8, 8], strides = [1, 1]} : vector<8x32xbf16> to vector<8x8xbf16>
    %cst_19 = arith.constant dense<0.000000e+00> : vector<8x8xf32>
    %39 = tpu.matmul %38, %36, %cst_19 {dimension_numbers = #tpu.dot_dimension_numbers<[1], [1], [0], [0], [0, 0, 1, 0], [], []>} : vector<8x8xbf16>, vector<8x8xbf16>, vector<8x8xf32> -> vector<8x8xf32>
    %cst_20 = arith.constant dense<0xFF800000> : vector<8xf32>
    %40 = vector.multi_reduction <maximumf>, %39, %cst_20 [1] : vector<8x8xf32> to vector<8xf32>
    %41 = vector.shape_cast %40 : vector<8xf32> to vector<8x1xf32>
    %42 = vector.broadcast %41 : vector<8x1xf32> to vector<8x8xf32>
    %43 = arith.subf %39, %42 : vector<8x8xf32>
    %44 = math.exp %43 : vector<8x8xf32>
    %cst_21 = arith.constant dense<0.000000e+00> : vector<8xf32>
    %45 = vector.multi_reduction <add>, %44, %cst_21 [1] : vector<8x8xf32> to vector<8xf32>
    %46 = vector.shape_cast %45 : vector<8xf32> to vector<8x1xf32>
    %47 = tpu.reciprocal %46 {approx = true} : vector<8x1xf32> -> vector<8x1xf32>
    %48 = vector.broadcast %47 : vector<8x1xf32> to vector<8x8xf32>
    %49 = arith.mulf %44, %48 : vector<8x8xf32>
    %50 = arith.truncf %49 : vector<8x8xf32> to vector<8x8xbf16>
    %cst_22 = arith.constant dense<0.000000e+00> : vector<8x8xf32>
    %51 = tpu.matmul %50, %37, %cst_22 {dimension_numbers = #tpu.dot_dimension_numbers<[1], [0], [0], [1], [0, 0, 1, 1], [], []>} : vector<8x8xbf16>, vector<8x8xbf16>, vector<8x8xf32> -> vector<8x8xf32>
    %52 = arith.truncf %51 : vector<8x8xf32> to vector<8x8xbf16>
    %c0_23 = arith.constant 0 : index
    %c8_24 = arith.constant 8 : index
    %53 = vector.load %arg20[%c0_23, %c8_24] : memref<8x32xbf16, #tpu.memory_space<vmem>>, vector<8x8xbf16>
    tpu.vector_store %arg20[%c0_23, %c8_24], %52 {strides = array<i32>} : memref<8x32xbf16, #tpu.memory_space<vmem>>, vector<8x8xbf16>,
    %c0_25 = arith.constant 0 : index
    %c16 = arith.constant 16 : index
    %54 = vector.load %arg19[%c0_25, %c16] : memref<8x64xbf16, #tpu.memory_space<vmem>>, vector<8x8xbf16>
    %c0_26 = arith.constant 0 : index
    %c48 = arith.constant 48 : index
    %55 = vector.load %arg19[%c0_26, %c48] : memref<8x64xbf16, #tpu.memory_space<vmem>>, vector<8x8xbf16>
    %56 = vector.extract_strided_slice %17 {offsets = [0, 16], sizes = [8, 8], strides = [1, 1]} : vector<8x32xbf16> to vector<8x8xbf16>
    %cst_27 = arith.constant dense<0.000000e+00> : vector<8x8xf32>
    %57 = tpu.matmul %56, %54, %cst_27 {dimension_numbers = #tpu.dot_dimension_numbers<[1], [1], [0], [0], [0, 0, 1, 0], [], []>} : vector<8x8xbf16>, vector<8x8xbf16>, vector<8x8xf32> -> vector<8x8xf32>
    %cst_28 = arith.constant dense<0xFF800000> : vector<8xf32>
    %58 = vector.multi_reduction <maximumf>, %57, %cst_28 [1] : vector<8x8xf32> to vector<8xf32>
    %59 = vector.shape_cast %58 : vector<8xf32> to vector<8x1xf32>
    %60 = vector.broadcast %59 : vector<8x1xf32> to vector<8x8xf32>
    %61 = arith.subf %57, %60 : vector<8x8xf32>
    %62 = math.exp %61 : vector<8x8xf32>
    %cst_29 = arith.constant dense<0.000000e+00> : vector<8xf32>
    %63 = vector.multi_reduction <add>, %62, %cst_29 [1] : vector<8x8xf32> to vector<8xf32>
    %64 = vector.shape_cast %63 : vector<8xf32> to vector<8x1xf32>
    %65 = tpu.reciprocal %64 {approx = true} : vector<8x1xf32> -> vector<8x1xf32>
    %66 = vector.broadcast %65 : vector<8x1xf32> to vector<8x8xf32>
    %67 = arith.mulf %62, %66 : vector<8x8xf32>
    %68 = arith.truncf %67 : vector<8x8xf32> to vector<8x8xbf16>
    %cst_30 = arith.constant dense<0.000000e+00> : vector<8x8xf32>
    %69 = tpu.matmul %68, %55, %cst_30 {dimension_numbers = #tpu.dot_dimension_numbers<[1], [0], [0], [1], [0, 0, 1, 1], [], []>} : vector<8x8xbf16>, vector<8x8xbf16>, vector<8x8xf32> -> vector<8x8xf32>
    %70 = arith.truncf %69 : vector<8x8xf32> to vector<8x8xbf16>
    %c0_31 = arith.constant 0 : index
    %c16_32 = arith.constant 16 : index
    %71 = vector.load %arg20[%c0_31, %c16_32] : memref<8x32xbf16, #tpu.memory_space<vmem>>, vector<8x8xbf16>
    tpu.vector_store %arg20[%c0_31, %c16_32], %70 {strides = array<i32>} : memref<8x32xbf16, #tpu.memory_space<vmem>>, vector<8x8xbf16>,
    %c0_33 = arith.constant 0 : index
    %c24 = arith.constant 24 : index
    %72 = vector.load %arg19[%c0_33, %c24] : memref<8x64xbf16, #tpu.memory_space<vmem>>, vector<8x8xbf16>
    %c0_34 = arith.constant 0 : index
    %c56 = arith.constant 56 : index
    %73 = vector.load %arg19[%c0_34, %c56] : memref<8x64xbf16, #tpu.memory_space<vmem>>, vector<8x8xbf16>
    %74 = vector.extract_strided_slice %17 {offsets = [0, 24], sizes = [8, 8], strides = [1, 1]} : vector<8x32xbf16> to vector<8x8xbf16>
    %cst_35 = arith.constant dense<0.000000e+00> : vector<8x8xf32>
    %75 = tpu.matmul %74, %72, %cst_35 {dimension_numbers = #tpu.dot_dimension_numbers<[1], [1], [0], [0], [0, 0, 1, 0], [], []>} : vector<8x8xbf16>, vector<8x8xbf16>, vector<8x8xf32> -> vector<8x8xf32>
    %cst_36 = arith.constant dense<0xFF800000> : vector<8xf32>
    %76 = vector.multi_reduction <maximumf>, %75, %cst_36 [1] : vector<8x8xf32> to vector<8xf32>
    %77 = vector.shape_cast %76 : vector<8xf32> to vector<8x1xf32>
    %78 = vector.broadcast %77 : vector<8x1xf32> to vector<8x8xf32>
    %79 = arith.subf %75, %78 : vector<8x8xf32>
    %80 = math.exp %79 : vector<8x8xf32>
    %cst_37 = arith.constant dense<0.000000e+00> : vector<8xf32>
    %81 = vector.multi_reduction <add>, %80, %cst_37 [1] : vector<8x8xf32> to vector<8xf32>
    %82 = vector.shape_cast %81 : vector<8xf32> to vector<8x1xf32>
    %83 = tpu.reciprocal %82 {approx = true} : vector<8x1xf32> -> vector<8x1xf32>
    %84 = vector.broadcast %83 : vector<8x1xf32> to vector<8x8xf32>
    %85 = arith.mulf %80, %84 : vector<8x8xf32>
    %86 = arith.truncf %85 : vector<8x8xf32> to vector<8x8xbf16>
    %cst_38 = arith.constant dense<0.000000e+00> : vector<8x8xf32>
    %87 = tpu.matmul %86, %73, %cst_38 {dimension_numbers = #tpu.dot_dimension_numbers<[1], [0], [0], [1], [0, 0, 1, 1], [], []>} : vector<8x8xbf16>, vector<8x8xbf16>, vector<8x8xf32> -> vector<8x8xf32>
    %88 = arith.truncf %87 : vector<8x8xf32> to vector<8x8xbf16>
    %c0_39 = arith.constant 0 : index
    %c24_40 = arith.constant 24 : index
    %89 = vector.load %arg20[%c0_39, %c24_40] : memref<8x32xbf16, #tpu.memory_space<vmem>>, vector<8x8xbf16>
    tpu.vector_store %arg20[%c0_39, %c24_40], %88 {strides = array<i32>} : memref<8x32xbf16, #tpu.memory_space<vmem>>, vector<8x8xbf16>,
    %c0_41 = arith.constant 0 : index
    %c0_42 = arith.constant 0 : index
    %90 = vector.load %arg20[%c0_41, %c0_42] : memref<8x32xbf16, #tpu.memory_space<vmem>>, vector<8x32xbf16>
    %c0_43 = arith.constant 0 : index
    %c0_44 = arith.constant 0 : index
    %91 = vector.load %arg9[%c0_43, %c0_44] : memref<32x32xbf16, #tpu.memory_space<vmem>>, vector<32x32xbf16>
    %cst_45 = arith.constant dense<0.000000e+00> : vector<8x32xf32>
    %92 = tpu.matmul %90, %91, %cst_45 {dimension_numbers = #tpu.dot_dimension_numbers<[1], [0], [0], [1], [0, 0, 1, 1], [], []>} : vector<8x32xbf16>, vector<32x32xbf16>, vector<8x32xf32> -> vector<8x32xf32>
    %c0_46 = arith.constant 0 : index
    %c0_47 = arith.constant 0 : index
    %93 = vector.load %arg10[%c0_46, %c0_47] : memref<1x32xf32, #tpu.memory_space<vmem>>, vector<1x32xf32>
    %94 = vector.broadcast %93 : vector<1x32xf32> to vector<8x32xf32>
    %95 = arith.addf %92, %94 : vector<8x32xf32>
    %96 = arith.addf %7, %95 : vector<8x32xf32>
    %c0_48 = arith.constant 0 : index
    %c0_49 = arith.constant 0 : index
    %97 = vector.load %arg11[%c0_48, %c0_49] : memref<1x32xf32, #tpu.memory_space<vmem>>, vector<1x32xf32>
    %c0_50 = arith.constant 0 : index
    %c0_51 = arith.constant 0 : index
    %98 = vector.load %arg12[%c0_50, %c0_51] : memref<1x32xf32, #tpu.memory_space<vmem>>, vector<1x32xf32>
    %cst_52 = arith.constant dense<0.000000e+00> : vector<8xf32>
    %99 = vector.multi_reduction <add>, %96, %cst_52 [1] : vector<8x32xf32> to vector<8xf32>
    %100 = vector.shape_cast %99 : vector<8xf32> to vector<8x1xf32>
    %cst_53 = arith.constant 3.200000e+01 : f32
    %101 = vector.broadcast %cst_53 : f32 to vector<8x1xf32>
    %102 = arith.divf %100, %101 : vector<8x1xf32>
    %103 = vector.broadcast %102 : vector<8x1xf32> to vector<8x32xf32>
    %104 = arith.subf %96, %103 : vector<8x32xf32>
    %105 = arith.mulf %104, %104 : vector<8x32xf32>
    %cst_54 = arith.constant dense<0.000000e+00> : vector<8xf32>
    %106 = vector.multi_reduction <add>, %105, %cst_54 [1] : vector<8x32xf32> to vector<8xf32>
    %107 = vector.shape_cast %106 : vector<8xf32> to vector<8x1xf32>
    %cst_55 = arith.constant 3.200000e+01 : f32
    %108 = vector.broadcast %cst_55 : f32 to vector<8x1xf32>
    %109 = arith.divf %107, %108 : vector<8x1xf32>
    %110 = vector.broadcast %102 : vector<8x1xf32> to vector<8x32xf32>
    %111 = arith.subf %96, %110 : vector<8x32xf32>
    %cst_56 = arith.constant 9.99999974E-6 : f32
    %112 = vector.broadcast %cst_56 : f32 to vector<8x1xf32>
    %113 = arith.addf %109, %112 : vector<8x1xf32>
    %114 = math.rsqrt %113 : vector<8x1xf32>
    %115 = vector.broadcast %114 : vector<8x1xf32> to vector<8x32xf32>
    %116 = arith.mulf %111, %115 : vector<8x32xf32>
    %117 = vector.broadcast %97 : vector<1x32xf32> to vector<8x32xf32>
    %118 = arith.mulf %116, %117 : vector<8x32xf32>
    %119 = vector.broadcast %98 : vector<1x32xf32> to vector<8x32xf32>
    %120 = arith.addf %118, %119 : vector<8x32xf32>
    %121 = arith.truncf %120 : vector<8x32xf32> to vector<8x32xbf16>
    %c0_57 = arith.constant 0 : index
    %c0_58 = arith.constant 0 : index
    %122 = vector.load %arg13[%c0_57, %c0_58] : memref<32x128xbf16, #tpu.memory_space<vmem>>, vector<32x128xbf16>
    %cst_59 = arith.constant dense<0.000000e+00> : vector<8x128xf32>
    %123 = tpu.matmul %121, %122, %cst_59 {dimension_numbers = #tpu.dot_dimension_numbers<[1], [0], [0], [1], [0, 0, 1, 1], [], []>} : vector<8x32xbf16>, vector<32x128xbf16>, vector<8x128xf32> -> vector<8x128xf32>
    %c0_60 = arith.constant 0 : index
    %c0_61 = arith.constant 0 : index
    %124 = vector.load %arg14[%c0_60, %c0_61] : memref<1x128xf32, #tpu.memory_space<vmem>>, vector<1x128xf32>
    %125 = vector.broadcast %124 : vector<1x128xf32> to vector<8x128xf32>
    %126 = arith.addf %123, %125 : vector<8x128xf32>
    %cst_62 = arith.constant 0.000000e+00 : f32
    %127 = vector.broadcast %cst_62 : f32 to vector<8x128xf32>
    %128 = arith.maximumf %126, %127 : vector<8x128xf32>
    %129 = arith.truncf %128 : vector<8x128xf32> to vector<8x128xbf16>
    %c0_63 = arith.constant 0 : index
    %c0_64 = arith.constant 0 : index
    %130 = vector.load %arg15[%c0_63, %c0_64] : memref<128x32xbf16, #tpu.memory_space<vmem>>, vector<128x32xbf16>
    %cst_65 = arith.constant dense<0.000000e+00> : vector<8x32xf32>
    %131 = tpu.matmul %129, %130, %cst_65 {dimension_numbers = #tpu.dot_dimension_numbers<[1], [0], [0], [1], [0, 0, 1, 1], [], []>} : vector<8x128xbf16>, vector<128x32xbf16>, vector<8x32xf32> -> vector<8x32xf32>
    %c0_66 = arith.constant 0 : index
    %c0_67 = arith.constant 0 : index
    %132 = vector.load %arg16[%c0_66, %c0_67] : memref<1x32xf32, #tpu.memory_space<vmem>>, vector<1x32xf32>
    %133 = vector.broadcast %132 : vector<1x32xf32> to vector<8x32xf32>
    %134 = arith.addf %131, %133 : vector<8x32xf32>
    %135 = arith.addf %96, %134 : vector<8x32xf32>
    %c0_68 = arith.constant 0 : index
    %c0_69 = arith.constant 0 : index
    %c0_70 = arith.constant 0 : index
    %136 = vector.load %arg17[%c0_68, %c0_69, %c0_70] : memref<1x8x32xf32, #tpu.memory_space<vmem>>, vector<1x8x32xf32>
    %137 = vector.shape_cast %136 : vector<1x8x32xf32> to vector<8x32xf32>
    %138 = vector.shape_cast %135 : vector<8x32xf32> to vector<1x8x32xf32>
    tpu.vector_store %arg17[%c0_68, %c0_69, %c0_70], %138 {strides = array<i32>} : memref<1x8x32xf32, #tpu.memory_space<vmem>>, vector<1x8x32xf32>,
    return
  }
  func.func @transform_0(%arg0: i32, %arg1: i32) -> (i32, i32, i32) {
    %c0_i32 = arith.constant 0 : i32
    %c0_i32_0 = arith.constant 0 : i32
    %c0_i32_1 = arith.constant 0 : i32
    return %arg0, %c0_i32, %c0_i32_0 : i32, i32, i32
  }
  func.func @transform_1(%arg0: i32, %arg1: i32) -> (i32, i32) {
    %c0_i32 = arith.constant 0 : i32
    %c0_i32_0 = arith.constant 0 : i32
    %c0_i32_1 = arith.constant 0 : i32
    return %c0_i32, %c0_i32_0 : i32, i32
  }
  func.func @transform_2(%arg0: i32, %arg1: i32) -> (i32, i32) {
    %c0_i32 = arith.constant 0 : i32
    %c0_i32_0 = arith.constant 0 : i32
    %c0_i32_1 = arith.constant 0 : i32
    return %c0_i32, %c0_i32_0 : i32, i32
  }
  func.func @transform_3(%arg0: i32, %arg1: i32) -> (i32, i32) {
    %c0_i32 = arith.constant 0 : i32
    %c0_i32_0 = arith.constant 0 : i32
    %c0_i32_1 = arith.constant 0 : i32
    return %c0_i32, %c0_i32_0 : i32, i32
  }
  func.func @transform_4(%arg0: i32, %arg1: i32) -> (i32, i32) {
    %c0_i32 = arith.constant 0 : i32
    %c0_i32_0 = arith.constant 0 : i32
    %c0_i32_1 = arith.constant 0 : i32
    return %c0_i32, %c0_i32_0 : i32, i32
  }
  func.func @transform_5(%arg0: i32, %arg1: i32) -> (i32, i32) {
    %c0_i32 = arith.constant 0 : i32
    %c0_i32_0 = arith.constant 0 : i32
    %c0_i32_1 = arith.constant 0 : i32
    return %c0_i32, %c0_i32_0 : i32, i32
  }
  func.func @transform_6(%arg0: i32, %arg1: i32) -> (i32, i32) {
    %c0_i32 = arith.constant 0 : i32
    %c0_i32_0 = arith.constant 0 : i32
    %c0_i32_1 = arith.constant 0 : i32
    return %c0_i32, %c0_i32_0 : i32, i32
  }
  func.func @transform_7(%arg0: i32, %arg1: i32) -> (i32, i32) {
    %c0_i32 = arith.constant 0 : i32
    %c0_i32_0 = arith.constant 0 : i32
    %c0_i32_1 = arith.constant 0 : i32
    return %c0_i32, %c0_i32_0 : i32, i32
  }
  func.func @transform_8(%arg0: i32, %arg1: i32) -> (i32, i32) {
    %c0_i32 = arith.constant 0 : i32
    %c0_i32_0 = arith.constant 0 : i32
    %c0_i32_1 = arith.constant 0 : i32
    return %c0_i32, %c0_i32_0 : i32, i32
  }
  func.func @transform_9(%arg0: i32, %arg1: i32) -> (i32, i32) {
    %c0_i32 = arith.constant 0 : i32
    %c0_i32_0 = arith.constant 0 : i32
    %c0_i32_1 = arith.constant 0 : i32
    return %c0_i32, %c0_i32_0 : i32, i32
  }
  func.func @transform_10(%arg0: i32, %arg1: i32) -> (i32, i32) {
    %c0_i32 = arith.constant 0 : i32
    %c0_i32_0 = arith.constant 0 : i32
    %c0_i32_1 = arith.constant 0 : i32
    return %c0_i32, %c0_i32_0 : i32, i32
  }
  func.func @transform_11(%arg0: i32, %arg1: i32) -> (i32, i32) {
    %c0_i32 = arith.constant 0 : i32
    %c0_i32_0 = arith.constant 0 : i32
    %c0_i32_1 = arith.constant 0 : i32
    return %c0_i32, %c0_i32_0 : i32, i32
  }
  func.func @transform_12(%arg0: i32, %arg1: i32) -> (i32, i32) {
    %c0_i32 = arith.constant 0 : i32
    %c0_i32_0 = arith.constant 0 : i32
    %c0_i32_1 = arith.constant 0 : i32
    return %c0_i32, %c0_i32_0 : i32, i32
  }
  func.func @transform_13(%arg0: i32, %arg1: i32) -> (i32, i32) {
    %c0_i32 = arith.constant 0 : i32
    %c0_i32_0 = arith.constant 0 : i32
    %c0_i32_1 = arith.constant 0 : i32
    return %c0_i32, %c0_i32_0 : i32, i32
  }
  func.func @transform_14(%arg0: i32, %arg1: i32) -> (i32, i32) {
    %c0_i32 = arith.constant 0 : i32
    %c0_i32_0 = arith.constant 0 : i32
    %c0_i32_1 = arith.constant 0 : i32
    return %c0_i32, %c0_i32_0 : i32, i32
  }
  func.func @transform_15(%arg0: i32, %arg1: i32) -> (i32, i32, i32) {
    %c0_i32 = arith.constant 0 : i32
    %c0_i32_0 = arith.constant 0 : i32
    return %arg0, %arg1, %c0_i32 : i32, i32, i32
  }
}

</mosaic_0001>

<llo_original>
// kernel: tpu_custom_call.1
$region0: #{tpu_custom_call.1}
  #allocation0 [shape = 'u32[]', space=smem, size = 0x4, offset = 0x4, fixed_abs, tag = 'smem constant byte address 0x4 - core index']
  #allocation1 [shape = 'u32[144,128]{1,0:T(1,128)}', space=vmem, size = 0x12000, scoped, tag = 'internal scratch']
  #allocation2 [shape = 'bf16[8,32]{1,0:T(8,128)(2,1)}', space=vmem, size = 0x800, scoped, tag = 'scratch operand']
  #allocation3 [shape = 'bf16[8,64]{1,0:T(8,128)(2,1)}', space=vmem, size = 0x800, scoped, tag = 'scratch operand']
  #allocation4 [shape = 'bf16[8,32]{1,0:T(8,128)(2,1)}', space=vmem, size = 0x800, scoped, tag = 'scratch operand']
  %s0 = inlined_call_operand.vmem [shape: f32[2,8,32], index: 0, kind: input, shape index: {}]
  %s1 = inlined_call_operand.vmem [shape: f32[1,32], index: 1, kind: input, shape index: {}]
  %s2 = inlined_call_operand.vmem [shape: f32[1,32], index: 2, kind: input, shape index: {}]
  %s3 = inlined_call_operand.vmem [shape: bf16[32,32], index: 3, kind: input, shape index: {}]
  %s4 = inlined_call_operand.vmem [shape: f32[1,32], index: 4, kind: input, shape index: {}]
  %s5 = inlined_call_operand.vmem [shape: bf16[32,64], index: 5, kind: input, shape index: {}]
  %s6 = inlined_call_operand.vmem [shape: f32[1,64], index: 6, kind: input, shape index: {}]
  %s7 = inlined_call_operand.vmem [shape: bf16[32,32], index: 7, kind: input, shape index: {}]
  %s8 = inlined_call_operand.vmem [shape: f32[1,32], index: 8, kind: input, shape index: {}]
  %s9 = inlined_call_operand.vmem [shape: f32[1,32], index: 9, kind: input, shape index: {}]
  %s10 = inlined_call_operand.vmem [shape: f32[1,32], index: 10, kind: input, shape index: {}]
  %s11 = inlined_call_operand.vmem [shape: bf16[32,128], index: 11, kind: input, shape index: {}]
  %s12 = inlined_call_operand.vmem [shape: f32[1,128], index: 12, kind: input, shape index: {}]
  %s13 = inlined_call_operand.vmem [shape: bf16[128,32], index: 13, kind: input, shape index: {}]
  %s14 = inlined_call_operand.vmem [shape: f32[1,32], index: 14, kind: input, shape index: {}]
  %s15 = inlined_call_operand.hbm [shape: f32[2,8,32], index: 15, kind: output, shape index: {}]
  %s16 = sld [smem:[#allocation0]]
  $region97: #{tpu_custom_call.1} parent=0
    _
  %s18 = ssub.s32 1, %s16
  %s19 = scalar_select 0, %s18, %s16
  $region1: #{tpu_custom_call.1} parent=0
    #allocation5 [shape = 'u8[8192]{0}', space=vmem, size = 0x2000, scoped, tag = 'output window, operand 0']
    #allocation6 [shape = 's32[2]{0}', space=sflag, size = 0x8, scoped, tag = 'scoped memory for tpu_custom_call.1']
    %20 = vsyncpa [#allocation6], 0
    %s21 = scalar_lea.sflag [#allocation6], 1
    %22 = vsyncpa %s21, 0
    loop: start=0, step=1, limit=4
    $region2: #{tpu_custom_call.1} parent=1 // loop_pre_header
      _
    $region3: #{tpu_custom_call.1} parent=1 // loop_header
      %s24 = sphi 0, %s28
      %p25 = scmp.ge.s32.totalorder %s24, 4
      %s31 = sphi 0, %s43
      %s32 = sphi 0, %s39
      %s33 = sphi 0, %s31
      %s34 = sphi 0, %s32
      %s35 = sphi 0, %s33
      %s36 = sphi 0, %s34
      %s46 = sphi 0, %s48
      %s49 = sphi 0, %s46
      %s50 = sphi 0, %s49
      %s66 = sphi 0, %s50
      %s70 = sphi 0, %s70
      %s72 = sphi 0, %s70
      %s73 = sphi 0, %s72
      %s87 = sphi 0, %s73
      %s91 = sphi 0, %s91
      %s93 = sphi 0, %s91
      %s94 = sphi 0, %s93
      %s108 = sphi 0, %s94
      %s112 = sphi 0, %s112
      %s114 = sphi 0, %s112
      %s115 = sphi 0, %s114
      %s129 = sphi 0, %s115
      %s133 = sphi 0, %s133
      %s135 = sphi 0, %s133
      %s136 = sphi 0, %s135
      %s150 = sphi 0, %s136
      %s154 = sphi 0, %s154
      %s156 = sphi 0, %s154
      %s157 = sphi 0, %s156
      %s171 = sphi 0, %s157
      %s175 = sphi 0, %s175
      %s177 = sphi 0, %s175
      %s178 = sphi 0, %s177
      %s192 = sphi 0, %s178
      %s196 = sphi 0, %s196
      %s198 = sphi 0, %s196
      %s199 = sphi 0, %s198
      %s213 = sphi 0, %s199
      %s217 = sphi 0, %s217
      %s219 = sphi 0, %s217
      %s220 = sphi 0, %s219
      %s234 = sphi 0, %s220
      %s238 = sphi 0, %s238
      %s240 = sphi 0, %s238
      %s241 = sphi 0, %s240
      %s255 = sphi 0, %s241
      %s259 = sphi 0, %s259
      %s261 = sphi 0, %s259
      %s262 = sphi 0, %s261
      %s276 = sphi 0, %s262
      %s280 = sphi 0, %s280
      %s282 = sphi 0, %s280
      %s283 = sphi 0, %s282
      %s297 = sphi 0, %s283
      %s301 = sphi 0, %s301
      %s303 = sphi 0, %s301
      %s304 = sphi 0, %s303
      %s318 = sphi 0, %s304
      %s322 = sphi 0, %s322
      %s324 = sphi 0, %s322
      %s325 = sphi 0, %s324
      %s339 = sphi 0, %s325
      %s343 = sphi 0, %s343
      %s345 = sphi 0, %s343
      %s346 = sphi 0, %s345
      %s360 = sphi 0, %s346
      %s368 = sphi 0, %s370
      %s371 = sphi 0, %s368
      %s372 = sphi 0, %s371
      %s388 = sphi 0, %s372
    $region4: #{tpu_custom_call.1} parent=1 // loop_header_branch
      %27 = sbr.rel (%p25) target = $region8
    $region5: #{tpu_custom_call.1} parent=1 // loop_body
      %s29 = ssub.s32 %s24, 1
      %s30 = ssub.s32 %s24, 2
      %s37 = sadd.s32 1, %s32
      %p38 = scmp.ge.s32.totalorder %s37, 1
      %s39 = scalar_select %p38, 0, %s37
      %s40 = sadd.s32 1, %s31
      %s41 = scalar_select %p38, %s40, %s31
      %p42 = scmp.ge.s32.totalorder %s41, 2
      %s43 = scalar_select %p42, 0, %s41
      %s44 = ssub.s32 %s31, %s43
      %p45 = scmp.eq.s32.totalorder %s44, 0
      %s47 = sadd.s32 %s46, 1
      %s48 = scalar_select %p45, %s46, %s47
      %p51 = pneg %p45
      %p52 = scmp.eq.s32.totalorder %s24, 1
      %p53 = por %p51, %p52
      %p54 = scmp.ne.s32.totalorder %s46, %s49
      %p55 = scmp.eq.s32.totalorder %s24, 0
      %p56 = por %p54, %p55
      %p57 = scmp.ne.s32.totalorder %s46, %s49
      %p58 = scmp.eq.s32.totalorder %s29, 1
      %p59 = por %p57, %p58
      %p60 = scmp.ne.s32.totalorder %s49, %s50
      %p61 = scmp.eq.s32.totalorder %s29, 0
      %p62 = por %p60, %p61
      %p63 = scmp.ne.s32.totalorder %s49, %s50
      %p64 = scmp.eq.s32.totalorder %s30, 1
      %p65 = por %p63, %p64
      %p67 = scmp.ne.s32.totalorder %s50, %s66
      %p68 = scmp.eq.s32.totalorder %s30, 0
      %p69 = por %p67, %p68
      %s71 = sadd.s32 %s70, 1
      %p74 = scmp.eq.s32.totalorder %s24, 1
      %p75 = scmp.ne.s32.totalorder %s70, %s72
      %p76 = scmp.eq.s32.totalorder %s24, 0
      %p77 = por %p75, %p76
      %p78 = scmp.ne.s32.totalorder %s70, %s72
      %p79 = scmp.eq.s32.totalorder %s29, 1
      %p80 = por %p78, %p79
      %p81 = scmp.ne.s32.totalorder %s72, %s73
      %p82 = scmp.eq.s32.totalorder %s29, 0
      %p83 = por %p81, %p82
      %p84 = scmp.ne.s32.totalorder %s72, %s73
      %p85 = scmp.eq.s32.totalorder %s30, 1
      %p86 = por %p84, %p85
      %p88 = scmp.ne.s32.totalorder %s73, %s87
      %p89 = scmp.eq.s32.totalorder %s30, 0
      %p90 = por %p88, %p89
      %s92 = sadd.s32 %s91, 1
      %p95 = scmp.eq.s32.totalorder %s24, 1
      %p96 = scmp.ne.s32.totalorder %s91, %s93
      %p97 = scmp.eq.s32.totalorder %s24, 0
      %p98 = por %p96, %p97
      %p99 = scmp.ne.s32.totalorder %s91, %s93
      %p100 = scmp.eq.s32.totalorder %s29, 1
      %p101 = por %p99, %p100
      %p102 = scmp.ne.s32.totalorder %s93, %s94
      %p103 = scmp.eq.s32.totalorder %s29, 0
      %p104 = por %p102, %p103
      %p105 = scmp.ne.s32.totalorder %s93, %s94
      %p106 = scmp.eq.s32.totalorder %s30, 1
      %p107 = por %p105, %p106
      %p109 = scmp.ne.s32.totalorder %s94, %s108
      %p110 = scmp.eq.s32.totalorder %s30, 0
      %p111 = por %p109, %p110
      %s113 = sadd.s32 %s112, 1
      %p116 = scmp.eq.s32.totalorder %s24, 1
      %p117 = scmp.ne.s32.totalorder %s112, %s114
      %p118 = scmp.eq.s32.totalorder %s24, 0
      %p119 = por %p117, %p118
      %p120 = scmp.ne.s32.totalorder %s112, %s114
      %p121 = scmp.eq.s32.totalorder %s29, 1
      %p122 = por %p120, %p121
      %p123 = scmp.ne.s32.totalorder %s114, %s115
      %p124 = scmp.eq.s32.totalorder %s29, 0
      %p125 = por %p123, %p124
      %p126 = scmp.ne.s32.totalorder %s114, %s115
      %p127 = scmp.eq.s32.totalorder %s30, 1
      %p128 = por %p126, %p127
      %p130 = scmp.ne.s32.totalorder %s115, %s129
      %p131 = scmp.eq.s32.totalorder %s30, 0
      %p132 = por %p130, %p131
      %s134 = sadd.s32 %s133, 1
      %p137 = scmp.eq.s32.totalorder %s24, 1
      %p138 = scmp.ne.s32.totalorder %s133, %s135
      %p139 = scmp.eq.s32.totalorder %s24, 0
      %p140 = por %p138, %p139
      %p141 = scmp.ne.s32.totalorder %s133, %s135
      %p142 = scmp.eq.s32.totalorder %s29, 1
      %p143 = por %p141, %p142
      %p144 = scmp.ne.s32.totalorder %s135, %s136
      %p145 = scmp.eq.s32.totalorder %s29, 0
      %p146 = por %p144, %p145
      %p147 = scmp.ne.s32.totalorder %s135, %s136
      %p148 = scmp.eq.s32.totalorder %s30, 1
      %p149 = por %p147, %p148
      %p151 = scmp.ne.s32.totalorder %s136, %s150
      %p152 = scmp.eq.s32.totalorder %s30, 0
      %p153 = por %p151, %p152
      %s155 = sadd.s32 %s154, 1
      %p158 = scmp.eq.s32.totalorder %s24, 1
      %p159 = scmp.ne.s32.totalorder %s154, %s156
      %p160 = scmp.eq.s32.totalorder %s24, 0
      %p161 = por %p159, %p160
      %p162 = scmp.ne.s32.totalorder %s154, %s156
      %p163 = scmp.eq.s32.totalorder %s29, 1
      %p164 = por %p162, %p163
      %p165 = scmp.ne.s32.totalorder %s156, %s157
      %p166 = scmp.eq.s32.totalorder %s29, 0
      %p167 = por %p165, %p166
      %p168 = scmp.ne.s32.totalorder %s156, %s157
      %p169 = scmp.eq.s32.totalorder %s30, 1
      %p170 = por %p168, %p169
      %p172 = scmp.ne.s32.totalorder %s157, %s171
      %p173 = scmp.eq.s32.totalorder %s30, 0
      %p174 = por %p172, %p173
      %s176 = sadd.s32 %s175, 1
      %p179 = scmp.eq.s32.totalorder %s24, 1
      %p180 = scmp.ne.s32.totalorder %s175, %s177
      %p181 = scmp.eq.s32.totalorder %s24, 0
      %p182 = por %p180, %p181
      %p183 = scmp.ne.s32.totalorder %s175, %s177
      %p184 = scmp.eq.s32.totalorder %s29, 1
      %p185 = por %p183, %p184
      %p186 = scmp.ne.s32.totalorder %s177, %s178
      %p187 = scmp.eq.s32.totalorder %s29, 0
      %p188 = por %p186, %p187
      %p189 = scmp.ne.s32.totalorder %s177, %s178
      %p190 = scmp.eq.s32.totalorder %s30, 1
      %p191 = por %p189, %p190
      %p193 = scmp.ne.s32.totalorder %s178, %s192
      %p194 = scmp.eq.s32.totalorder %s30, 0
      %p195 = por %p193, %p194
      %s197 = sadd.s32 %s196, 1
      %p200 = scmp.eq.s32.totalorder %s24, 1
      %p201 = scmp.ne.s32.totalorder %s196, %s198
      %p202 = scmp.eq.s32.totalorder %s24, 0
      %p203 = por %p201, %p202
      %p204 = scmp.ne.s32.totalorder %s196, %s198
      %p205 = scmp.eq.s32.totalorder %s29, 1
      %p206 = por %p204, %p205
      %p207 = scmp.ne.s32.totalorder %s198, %s199
      %p208 = scmp.eq.s32.totalorder %s29, 0
      %p209 = por %p207, %p208
      %p210 = scmp.ne.s32.totalorder %s198, %s199
      %p211 = scmp.eq.s32.totalorder %s30, 1
      %p212 = por %p210, %p211
      %p214 = scmp.ne.s32.totalorder %s199, %s213
      %p215 = scmp.eq.s32.totalorder %s30, 0
      %p216 = por %p214, %p215
      %s218 = sadd.s32 %s217, 1
      %p221 = scmp.eq.s32.totalorder %s24, 1
      %p222 = scmp.ne.s32.totalorder %s217, %s219
      %p223 = scmp.eq.s32.totalorder %s24, 0
      %p224 = por %p222, %p223
      %p225 = scmp.ne.s32.totalorder %s217, %s219
      %p226 = scmp.eq.s32.totalorder %s29, 1
      %p227 = por %p225, %p226
      %p228 = scmp.ne.s32.totalorder %s219, %s220
      %p229 = scmp.eq.s32.totalorder %s29, 0
      %p230 = por %p228, %p229
      %p231 = scmp.ne.s32.totalorder %s219, %s220
      %p232 = scmp.eq.s32.totalorder %s30, 1
      %p233 = por %p231, %p232
      %p235 = scmp.ne.s32.totalorder %s220, %s234
      %p236 = scmp.eq.s32.totalorder %s30, 0
      %p237 = por %p235, %p236
      %s239 = sadd.s32 %s238, 1
      %p242 = scmp.eq.s32.totalorder %s24, 1
      %p243 = scmp.ne.s32.totalorder %s238, %s240
      %p244 = scmp.eq.s32.totalorder %s24, 0
      %p245 = por %p243, %p244
      %p246 = scmp.ne.s32.totalorder %s238, %s240
      %p247 = scmp.eq.s32.totalorder %s29, 1
      %p248 = por %p246, %p247
      %p249 = scmp.ne.s32.totalorder %s240, %s241
      %p250 = scmp.eq.s32.totalorder %s29, 0
      %p251 = por %p249, %p250
      %p252 = scmp.ne.s32.totalorder %s240, %s241
      %p253 = scmp.eq.s32.totalorder %s30, 1
      %p254 = por %p252, %p253
      %p256 = scmp.ne.s32.totalorder %s241, %s255
      %p257 = scmp.eq.s32.totalorder %s30, 0
      %p258 = por %p256, %p257
      %s260 = sadd.s32 %s259, 1
      %p263 = scmp.eq.s32.totalorder %s24, 1
      %p264 = scmp.ne.s32.totalorder %s259, %s261
      %p265 = scmp.eq.s32.totalorder %s24, 0
      %p266 = por %p264, %p265
      %p267 = scmp.ne.s32.totalorder %s259, %s261
      %p268 = scmp.eq.s32.totalorder %s29, 1
      %p269 = por %p267, %p268
      %p270 = scmp.ne.s32.totalorder %s261, %s262
      %p271 = scmp.eq.s32.totalorder %s29, 0
      %p272 = por %p270, %p271
      %p273 = scmp.ne.s32.totalorder %s261, %s262
      %p274 = scmp.eq.s32.totalorder %s30, 1
      %p275 = por %p273, %p274
      %p277 = scmp.ne.s32.totalorder %s262, %s276
      %p278 = scmp.eq.s32.totalorder %s30, 0
      %p279 = por %p277, %p278
      %s281 = sadd.s32 %s280, 1
      %p284 = scmp.eq.s32.totalorder %s24, 1
      %p285 = scmp.ne.s32.totalorder %s280, %s282
      %p286 = scmp.eq.s32.totalorder %s24, 0
      %p287 = por %p285, %p286
      %p288 = scmp.ne.s32.totalorder %s280, %s282
      %p289 = scmp.eq.s32.totalorder %s29, 1
      %p290 = por %p288, %p289
      %p291 = scmp.ne.s32.totalorder %s282, %s283
      %p292 = scmp.eq.s32.totalorder %s29, 0
      %p293 = por %p291, %p292
      %p294 = scmp.ne.s32.totalorder %s282, %s283
      %p295 = scmp.eq.s32.totalorder %s30, 1
      %p296 = por %p294, %p295
      %p298 = scmp.ne.s32.totalorder %s283, %s297
      %p299 = scmp.eq.s32.totalorder %s30, 0
      %p300 = por %p298, %p299
      %s302 = sadd.s32 %s301, 1
      %p305 = scmp.eq.s32.totalorder %s24, 1
      %p306 = scmp.ne.s32.totalorder %s301, %s303
      %p307 = scmp.eq.s32.totalorder %s24, 0
      %p308 = por %p306, %p307
      %p309 = scmp.ne.s32.totalorder %s301, %s303
      %p310 = scmp.eq.s32.totalorder %s29, 1
      %p311 = por %p309, %p310
      %p312 = scmp.ne.s32.totalorder %s303, %s304
      %p313 = scmp.eq.s32.totalorder %s29, 0
      %p314 = por %p312, %p313
      %p315 = scmp.ne.s32.totalorder %s303, %s304
      %p316 = scmp.eq.s32.totalorder %s30, 1
      %p317 = por %p315, %p316
      %p319 = scmp.ne.s32.totalorder %s304, %s318
      %p320 = scmp.eq.s32.totalorder %s30, 0
      %p321 = por %p319, %p320
      %s323 = sadd.s32 %s322, 1
      %p326 = scmp.eq.s32.totalorder %s24, 1
      %p327 = scmp.ne.s32.totalorder %s322, %s324
      %p328 = scmp.eq.s32.totalorder %s24, 0
      %p329 = por %p327, %p328
      %p330 = scmp.ne.s32.totalorder %s322, %s324
      %p331 = scmp.eq.s32.totalorder %s29, 1
      %p332 = por %p330, %p331
      %p333 = scmp.ne.s32.totalorder %s324, %s325
      %p334 = scmp.eq.s32.totalorder %s29, 0
      %p335 = por %p333, %p334
      %p336 = scmp.ne.s32.totalorder %s324, %s325
      %p337 = scmp.eq.s32.totalorder %s30, 1
      %p338 = por %p336, %p337
      %p340 = scmp.ne.s32.totalorder %s325, %s339
      %p341 = scmp.eq.s32.totalorder %s30, 0
      %p342 = por %p340, %p341
      %s344 = sadd.s32 %s343, 1
      %p347 = scmp.eq.s32.totalorder %s24, 1
      %p348 = scmp.ne.s32.totalorder %s343, %s345
      %p349 = scmp.eq.s32.totalorder %s24, 0
      %p350 = por %p348, %p349
      %p351 = scmp.ne.s32.totalorder %s343, %s345
      %p352 = scmp.eq.s32.totalorder %s29, 1
      %p353 = por %p351, %p352
      %p354 = scmp.ne.s32.totalorder %s345, %s346
      %p355 = scmp.eq.s32.totalorder %s29, 0
      %p356 = por %p354, %p355
      %p357 = scmp.ne.s32.totalorder %s345, %s346
      %p358 = scmp.eq.s32.totalorder %s30, 1
      %p359 = por %p357, %p358
      %p361 = scmp.ne.s32.totalorder %s346, %s360
      %p362 = scmp.eq.s32.totalorder %s30, 0
      %p363 = por %p361, %p362
      %s364 = ssub.s32 %s31, %s43
      %s365 = ssub.s32 %s32, %s39
      %s366 = sor.u32 %s364, %s365
      %p367 = scmp.eq.s32.totalorder %s366, 0
      %s369 = sadd.s32 %s368, 1
      %s370 = scalar_select %p367, %s368, %s369
      %p373 = pneg %p367
      %p374 = scmp.eq.s32.totalorder %s24, 1
      %p375 = por %p373, %p374
      %p376 = scmp.ne.s32.totalorder %s368, %s371
      %p377 = scmp.eq.s32.totalorder %s24, 0
      %p378 = por %p376, %p377
      %p379 = scmp.ne.s32.totalorder %s368, %s371
      %p380 = scmp.eq.s32.totalorder %s29, 1
      %p381 = por %p379, %p380
      %p382 = scmp.ne.s32.totalorder %s371, %s372
      %p383 = scmp.eq.s32.totalorder %s29, 0
      %p384 = por %p382, %p383
      %p385 = scmp.ne.s32.totalorder %s371, %s372
      %p386 = scmp.eq.s32.totalorder %s30, 1
      %p387 = por %p385, %p386
      %p389 = scmp.ne.s32.totalorder %s372, %s388
      %p390 = scmp.eq.s32.totalorder %s30, 0
      %p391 = por %p389, %p390
      %p392 = scmp.le.s32.totalorder 1, %s24
      %p393 = scmp.lt.s32.totalorder %s24, 3
      %p394 = pnand %p392, %p393
      %p395 = pneg %p394
      // Predicated region
      $region9: #{tpu_custom_call.1} parent=5 // pred_check
        _
      $region10: #{tpu_custom_call.1} parent=5 // pred_check_branch
        %397 = sbr.rel (%p394) target = $region12
      $region11: #{tpu_custom_call.1} parent=5 // pred_region
        %s398 = ssub.s32 %s24, 1
        // Predicated region
        $region13: #{tpu_custom_call.1} parent=11 // pred_check
          %p399 = pneg %p83
        $region14: #{tpu_custom_call.1} parent=11 // pred_check_branch
          %401 = sbr.rel (%p399) target = $region16
        $region15: #{tpu_custom_call.1} parent=11 // pred_region
          _
        $region16: #{tpu_custom_call.1} parent=11 // pred_fallthru
          _
        // Predicated region
        $region17: #{tpu_custom_call.1} parent=11 // pred_check
          %p402 = pneg %p104
        $region18: #{tpu_custom_call.1} parent=11 // pred_check_branch
          %404 = sbr.rel (%p402) target = $region20
        $region19: #{tpu_custom_call.1} parent=11 // pred_region
          _
        $region20: #{tpu_custom_call.1} parent=11 // pred_fallthru
          _
        // Predicated region
        $region21: #{tpu_custom_call.1} parent=11 // pred_check
          %p405 = pneg %p125
        $region22: #{tpu_custom_call.1} parent=11 // pred_check_branch
          %407 = sbr.rel (%p405) target = $region24
        $region23: #{tpu_custom_call.1} parent=11 // pred_region
          _
        $region24: #{tpu_custom_call.1} parent=11 // pred_fallthru
          _
        // Predicated region
        $region25: #{tpu_custom_call.1} parent=11 // pred_check
          %p408 = pneg %p146
        $region26: #{tpu_custom_call.1} parent=11 // pred_check_branch
          %410 = sbr.rel (%p408) target = $region28
        $region27: #{tpu_custom_call.1} parent=11 // pred_region
          _
        $region28: #{tpu_custom_call.1} parent=11 // pred_fallthru
          _
        // Predicated region
        $region29: #{tpu_custom_call.1} parent=11 // pred_check
          %p411 = pneg %p167
        $region30: #{tpu_custom_call.1} parent=11 // pred_check_branch
          %413 = sbr.rel (%p411) target = $region32
        $region31: #{tpu_custom_call.1} parent=11 // pred_region
          _
        $region32: #{tpu_custom_call.1} parent=11 // pred_fallthru
          _
        // Predicated region
        $region33: #{tpu_custom_call.1} parent=11 // pred_check
          %p414 = pneg %p188
        $region34: #{tpu_custom_call.1} parent=11 // pred_check_branch
          %416 = sbr.rel (%p414) target = $region36
        $region35: #{tpu_custom_call.1} parent=11 // pred_region
          _
        $region36: #{tpu_custom_call.1} parent=11 // pred_fallthru
          _
        // Predicated region
        $region37: #{tpu_custom_call.1} parent=11 // pred_check
          %p417 = pneg %p209
        $region38: #{tpu_custom_call.1} parent=11 // pred_check_branch
          %419 = sbr.rel (%p417) target = $region40
        $region39: #{tpu_custom_call.1} parent=11 // pred_region
          _
        $region40: #{tpu_custom_call.1} parent=11 // pred_fallthru
          _
        // Predicated region
        $region41: #{tpu_custom_call.1} parent=11 // pred_check
          %p420 = pneg %p230
        $region42: #{tpu_custom_call.1} parent=11 // pred_check_branch
          %422 = sbr.rel (%p420) target = $region44
        $region43: #{tpu_custom_call.1} parent=11 // pred_region
          _
        $region44: #{tpu_custom_call.1} parent=11 // pred_fallthru
          _
        // Predicated region
        $region45: #{tpu_custom_call.1} parent=11 // pred_check
          %p423 = pneg %p251
        $region46: #{tpu_custom_call.1} parent=11 // pred_check_branch
          %425 = sbr.rel (%p423) target = $region48
        $region47: #{tpu_custom_call.1} parent=11 // pred_region
          _
        $region48: #{tpu_custom_call.1} parent=11 // pred_fallthru
          _
        // Predicated region
        $region49: #{tpu_custom_call.1} parent=11 // pred_check
          %p426 = pneg %p272
        $region50: #{tpu_custom_call.1} parent=11 // pred_check_branch
          %428 = sbr.rel (%p426) target = $region52
        $region51: #{tpu_custom_call.1} parent=11 // pred_region
          _
        $region52: #{tpu_custom_call.1} parent=11 // pred_fallthru
          _
        // Predicated region
        $region53: #{tpu_custom_call.1} parent=11 // pred_check
          %p429 = pneg %p293
        $region54: #{tpu_custom_call.1} parent=11 // pred_check_branch
          %431 = sbr.rel (%p429) target = $region56
        $region55: #{tpu_custom_call.1} parent=11 // pred_region
          _
        $region56: #{tpu_custom_call.1} parent=11 // pred_fallthru
          _
        // Predicated region
        $region57: #{tpu_custom_call.1} parent=11 // pred_check
          %p432 = pneg %p314
        $region58: #{tpu_custom_call.1} parent=11 // pred_check_branch
          %434 = sbr.rel (%p432) target = $region60
        $region59: #{tpu_custom_call.1} parent=11 // pred_region
          _
        $region60: #{tpu_custom_call.1} parent=11 // pred_fallthru
          _
        // Predicated region
        $region61: #{tpu_custom_call.1} parent=11 // pred_check
          %p435 = pneg %p335
        $region62: #{tpu_custom_call.1} parent=11 // pred_check_branch
          %437 = sbr.rel (%p435) target = $region64
        $region63: #{tpu_custom_call.1} parent=11 // pred_region
          _
        $region64: #{tpu_custom_call.1} parent=11 // pred_fallthru
          _
        // Predicated region
        $region65: #{tpu_custom_call.1} parent=11 // pred_check
          %p438 = pneg %p356
        $region66: #{tpu_custom_call.1} parent=11 // pred_check_branch
          %440 = sbr.rel (%p438) target = $region68
        $region67: #{tpu_custom_call.1} parent=11 // pred_region
          _
        $region68: #{tpu_custom_call.1} parent=11 // pred_fallthru
          _
      $region12: #{tpu_custom_call.1} parent=5 // pred_fallthru
        _
      %p441 = scmp.lt.s32.totalorder %s24, 2
      // Predicated region
      $region69: #{tpu_custom_call.1} parent=5 // pred_check
        %p442 = pneg %p441
      $region70: #{tpu_custom_call.1} parent=5 // pred_check_branch
        %444 = sbr.rel (%p442) target = $region72
      $region71: #{tpu_custom_call.1} parent=5 // pred_region
        // Predicated region
        $region73: #{tpu_custom_call.1} parent=71 // pred_check
          %p445 = pneg %p56
        $region74: #{tpu_custom_call.1} parent=71 // pred_check_branch
          %447 = sbr.rel (%p445) target = $region76
        $region75: #{tpu_custom_call.1} parent=71 // pred_region
          %p448 = scmp.lt.s32.totalorder %s31, 1
          %s449 = scalar_select %p448, %s31, 1
          %s450 = smul.addr %s449, 8
          %s451 = scalar_lea.vmem %s0, %s450
        $region76: #{tpu_custom_call.1} parent=71 // pred_fallthru
          _
      $region72: #{tpu_custom_call.1} parent=5 // pred_fallthru
        _
      %p452 = scmp.le.s32.totalorder 1, %s24
      %p453 = scmp.lt.s32.totalorder %s24, 3
      %p454 = pnand %p452, %p453
      %p455 = pneg %p454
      // Predicated region
      $region77: #{tpu_custom_call.1} parent=5 // pred_check
        _
      $region78: #{tpu_custom_call.1} parent=5 // pred_check_branch
        %457 = sbr.rel (%p454) target = $region80
      $region79: #{tpu_custom_call.1} parent=5 // pred_region
        %s458 = ssub.s32 %s24, 1
        %p459 = scmp.lt.s32.totalorder %s33, 1
        %s460 = scalar_select %p459, %s33, 1
        %s461 = smul.addr %s460, 8
        %s462 = scalar_lea.vmem %s0, %s461
        %p463 = pneg %p62
        %p464 = pneg %p59
        %p465 = pneg %p83
        %p466 = pneg %p80
        %p467 = pneg %p104
        %p468 = pneg %p101
        %p469 = pneg %p125
        %p470 = pneg %p122
        %p471 = pneg %p146
        %p472 = pneg %p143
        %p473 = pneg %p167
        %p474 = pneg %p164
        %p475 = pneg %p188
        %p476 = pneg %p185
        %p477 = pneg %p209
        %p478 = pneg %p206
        %p479 = pneg %p230
        %p480 = pneg %p227
        %p481 = pneg %p251
        %p482 = pneg %p248
        %p483 = pneg %p272
        %p484 = pneg %p269
        %p485 = pneg %p293
        %p486 = pneg %p290
        %p487 = pneg %p314
        %p488 = pneg %p311
        %p489 = pneg %p335
        %p490 = pneg %p332
        %p491 = pneg %p356
        %p492 = pneg %p353
        %p493 = pneg %p384
        %p494 = pneg %p381
        %s495 = sand.u32 %s371, 1
        %s496 = scalar_lea.sflag [#allocation6], %s495
        %s497 = sand.u32 %s371, 1
        %s498 = smul.addr %s497, 8
        %s499 = scalar_lea.vmem [#allocation5], %s498
        %p500 = scmp.lt.s32.totalorder %s33, 1
        %s501 = scalar_select %p500, %s33, 1
        %s502 = smul.addr %s501, 8
        %s503 = scalar_lea.vmem %s0, %s502
        %p505 = scmp.eq.s32.totalorder %s34, 0
        // Predicated region
        $region81: #{tpu_custom_call.1} parent=79 // pred_check
          %p506 = pneg %p505
        $region82: #{tpu_custom_call.1} parent=79 // pred_check_branch
          %508 = sbr.rel (%p506) target = $region84
        $region83: #{tpu_custom_call.1} parent=79 // pred_region
          %v509 = vld [vmem:[%s503] sm:$0xff]
          %v510 = vld [vmem:[%s1] sm:$0x1]
          %v511 = vld [vmem:[%s2] sm:$0x1]
          %vm512 = vcmask 261120
          %v513 = vsel %vm512, %v509, 0.0
          %514 = vadd.xlane.f32.xlu0 %v513
          %v515 = vpop.xlane.xlu0 %514
          %v516 = vrcp.pop 32.0
          %v517 = vmul.f32 %v515, %v516
          %v518 = vsub.f32 %v509, %v517
          %v519 = vmul.f32 %v518, %v518
          %v520 = vsel %vm512, %v519, 0.0
          %521 = vadd.xlane.f32.xlu0 %v520
          %v522 = vpop.xlane.xlu0 %521
          %v523 = vmul.f32 %v522, %v516
          %v524 = vadd.f32 %v523, 1e-05
          %v525 = vrsqrt.pop %v524
          %v526 = vmul.f32 %v518, %v525
          %v528 = vlaneseq
          %v529 = vshrl.u32 %v528, 7
          %v530 = vsub.s32 0, %v529
          %v531 = vrot.slane %v510, %v530
          %v533 = vmul.f32 %v526, %v531
          %v535 = vlaneseq
          %v536 = vshrl.u32 %v535, 7
          %v537 = vsub.s32 0, %v536
          %v538 = vrot.slane %v511, %v537
          %v540 = vadd.f32 %v533, %v538
          %v541 = vpack.c.bf16 %v540, %v540
          %vm542 = vcmask 257024
          %543 = vst.msk [vmem:[#allocation2] sm:$0xf] %vm542, %v541
          %v544 = vld [vmem:[%s5] sm:$0xf]
          %v545 = vld [vmem:[%s5 + $0x4] sm:$0xf]
          %v546 = vld [vmem:[%s5 + $0x8] sm:$0xf]
          %v547 = vld [vmem:[%s5 + $0xc] sm:$0xf]
          %v548 = vld [vmem:[%s6] sm:$0x1]
          %v550 = vlaneseq
          %v551 = vshrl.u32 %v550, 7
          %v552 = vsub.s32 0, %v551
          %v553 = vrot.slane %v548, %v552
          %v559 = vunpack.c.l.b16 %v544
          %v560 = vunpack.c.l.b16 %v545
          %v561 = vunpack.c.l.b16 %v546
          %v562 = vunpack.c.l.b16 %v547
          %v563 = vpack.c.b16 %v560, %v559
          %v564 = vpack.c.b16 %v562, %v561
          %v568 = vsel %vm512, %v541, 0
          %570 = vmatprep.subr.bf16.mxu0 0
          %571 = vmatpush1.bf16.msra.mxu0 %v563
          %572 = vmatprep.subr.bf16.mxu0 0
          %573 = vmatpush1.bf16.msra.mxu0 %v564
          %574 = vmatprep.subr.bf16.mxu0 0
          %575 = vmatpush1.bf16.msra.mxu0 0
          %576 = vmatprep.subr.bf16.mxu0 0
          %577 = vmatpush1.bf16.msra.mxu0 0
          %578 = vmatprep.subr.bf16.mxu0 0
          %579 = vmatpush1.bf16.msra.mxu0 0
          %580 = vmatprep.subr.bf16.mxu0 0
          %581 = vmatpush1.bf16.msra.mxu0 0
          %582 = vmatprep.subr.bf16.mxu0 0
          %583 = vmatpush1.bf16.msra.mxu0 0
          %584 = vmatprep.subr.bf16.mxu0 0
          %585 = vmatpush1.bf16.msra.mxu0 0
          %586 = vmatprep.subr.bf16.mxu0 0
          %587 = vmatpush1.bf16.msra.mxu0 0
          %588 = vmatprep.subr.bf16.mxu0 0
          %589 = vmatpush1.bf16.msra.mxu0 0
          %590 = vmatprep.subr.bf16.mxu0 0
          %591 = vmatpush1.bf16.msra.mxu0 0
          %592 = vmatprep.subr.bf16.mxu0 0
          %593 = vmatpush1.bf16.msra.mxu0 0
          %594 = vmatprep.subr.bf16.mxu0 0
          %595 = vmatpush1.bf16.msra.mxu0 0
          %596 = vmatprep.subr.bf16.mxu0 0
          %597 = vmatpush1.bf16.msra.mxu0 0
          %598 = vmatprep.subr.bf16.mxu0 0
          %599 = vmatpush1.bf16.msra.mxu0 0
          %600 = vmatprep.subr.bf16.mxu0 0
          %601 = vmatpush1.bf16.msra.mxu0 0
          %602 = vmatprep.mubr.bf16.mxu0 0
          %603 = vmatmul.mubr.bf16.gmra.mrb[0].mxu0 %v568
          %v604 = vpop.f32.mrb[0].mxu0
          %v605 = vadd.f32 %v553, %v604
          %v606 = vpop.f32.mrb[0].mxu0
          %v607 = vpop.f32.mrb[0].mxu0
          %v608 = vpop.f32.mrb[0].mxu0
          %609 = vdwg.mxu0
          %v610 = vpack.c.bf16 %v605, %v605
          %vm611 = vcmask 519168
          %612 = vst.msk [vmem:[#allocation3] sm:$0xf] %vm611, %v610
        $region84: #{tpu_custom_call.1} parent=79 // pred_fallthru
          _
        %s613 = smul.u32 %s34, 8
        %s614 = scalar_lea.vmem %s503, %s613
        %v615 = vld [vmem:[%s614] sm:$0xff]
        %s616 = sshra.s32 %s613, 3
        %s617 = sand.u32 %s613, 7
        %s618 = smul.addr %s616, 4
        %s619 = scalar_lea.vmem [#allocation2], %s618
        %v620 = vld [vmem:[%s619] sm:$0xf]
        %v621 = vld [vmem:[%s3] sm:$0xf]
        %v622 = vld [vmem:[%s3 + $0x4] sm:$0xf]
        %v623 = vld [vmem:[%s3 + $0x8] sm:$0xf]
        %v624 = vld [vmem:[%s3 + $0xc] sm:$0xf]
        %v625 = vld [vmem:[%s4] sm:$0x1]
        %v627 = vlaneseq
        %v628 = vshrl.u32 %v627, 7
        %v629 = vsub.s32 0, %v628
        %v630 = vrot.slane %v625, %v629
        %v636 = vunpack.c.l.b16 %v621
        %v637 = vunpack.c.l.b16 %v622
        %v638 = vunpack.c.l.b16 %v623
        %v639 = vunpack.c.l.b16 %v624
        %v640 = vpack.c.b16 %v637, %v636
        %v641 = vpack.c.b16 %v639, %v638
        %vm644 = vcmask 261120
        %v646 = vsel %vm644, %v620, 0
        %648 = vmatprep.subr.bf16.mxu0 0
        %649 = vmatpush1.bf16.msra.mxu0 %v640
        %650 = vmatprep.subr.bf16.mxu0 0
        %651 = vmatpush1.bf16.msra.mxu0 %v641
        %652 = vmatprep.subr.bf16.mxu0 0
        %653 = vmatpush1.bf16.msra.mxu0 0
        %654 = vmatprep.subr.bf16.mxu0 0
        %655 = vmatpush1.bf16.msra.mxu0 0
        %656 = vmatprep.subr.bf16.mxu0 0
        %657 = vmatpush1.bf16.msra.mxu0 0
        %658 = vmatprep.subr.bf16.mxu0 0
        %659 = vmatpush1.bf16.msra.mxu0 0
        %660 = vmatprep.subr.bf16.mxu0 0
        %661 = vmatpush1.bf16.msra.mxu0 0
        %662 = vmatprep.subr.bf16.mxu0 0
        %663 = vmatpush1.bf16.msra.mxu0 0
        %664 = vmatprep.subr.bf16.mxu0 0
        %665 = vmatpush1.bf16.msra.mxu0 0
        %666 = vmatprep.subr.bf16.mxu0 0
        %667 = vmatpush1.bf16.msra.mxu0 0
        %668 = vmatprep.subr.bf16.mxu0 0
        %669 = vmatpush1.bf16.msra.mxu0 0
        %670 = vmatprep.subr.bf16.mxu0 0
        %671 = vmatpush1.bf16.msra.mxu0 0
        %672 = vmatprep.subr.bf16.mxu0 0
        %673 = vmatpush1.bf16.msra.mxu0 0
        %674 = vmatprep.subr.bf16.mxu0 0
        %675 = vmatpush1.bf16.msra.mxu0 0
        %676 = vmatprep.subr.bf16.mxu0 0
        %677 = vmatpush1.bf16.msra.mxu0 0
        %678 = vmatprep.subr.bf16.mxu0 0
        %679 = vmatpush1.bf16.msra.mxu0 0
        %680 = vmatprep.mubr.bf16.mxu0 0
        %681 = vmatmul.mubr.bf16.gmra.mrb[0].mxu0 %v646
        %v682 = vpop.f32.mrb[0].mxu0
        %v683 = vadd.f32 %v630, %v682
        %v684 = vpop.f32.mrb[0].mxu0
        %v685 = vpop.f32.mrb[0].mxu0
        %v686 = vpop.f32.mrb[0].mxu0
        %687 = vdwg.mxu0
        %v688 = vmul.f32 %v683, 0.35355338
        %v689 = vpack.c.bf16 %v688, %v688
        %v690 = vld [vmem:[#allocation3] sm:$0xf]
        %vm691 = vcmask 64512
        %v693 = vsel %vm691, %v689, 0
        %v696 = vsel %vm691, %v690, 0
        %698 = vmatprep.subr.bf16.mxu0 0
        %699 = vmatpush1.bf16.xpose.msra.mxu0 %v696
        %700 = vmatprep.subr.bf16.mxu0 0
        %701 = vmatpush1.bf16.xpose.msra.mxu0 0
        %702 = vmatprep.subr.bf16.mxu0 0
        %703 = vmatpush1.bf16.xpose.msra.mxu0 0
        %704 = vmatprep.subr.bf16.mxu0 0
        %705 = vmatpush1.bf16.xpose.msra.mxu0 0
        %706 = vmatprep.subr.bf16.mxu0 0
        %707 = vmatpush1.bf16.xpose.msra.mxu0 0
        %708 = vmatprep.subr.bf16.mxu0 0
        %709 = vmatpush1.bf16.xpose.msra.mxu0 0
        %710 = vmatprep.subr.bf16.mxu0 0
        %711 = vmatpush1.bf16.xpose.msra.mxu0 0
        %712 = vmatprep.subr.bf16.mxu0 0
        %713 = vmatpush1.bf16.xpose.msra.mxu0 0
        %714 = vmatprep.subr.bf16.mxu0 0
        %715 = vmatpush1.bf16.xpose.msra.mxu0 0
        %716 = vmatprep.subr.bf16.mxu0 0
        %717 = vmatpush1.bf16.xpose.msra.mxu0 0
        %718 = vmatprep.subr.bf16.mxu0 0
        %719 = vmatpush1.bf16.xpose.msra.mxu0 0
        %720 = vmatprep.subr.bf16.mxu0 0
        %721 = vmatpush1.bf16.xpose.msra.mxu0 0
        %722 = vmatprep.subr.bf16.mxu0 0
        %723 = vmatpush1.bf16.xpose.msra.mxu0 0
        %724 = vmatprep.subr.bf16.mxu0 0
        %725 = vmatpush1.bf16.xpose.msra.mxu0 0
        %726 = vmatprep.subr.bf16.mxu0 0
        %727 = vmatpush1.bf16.xpose.msra.mxu0 0
        %728 = vmatprep.subr.bf16.mxu0 0
        %729 = vmatpush1.bf16.xpose.msra.mxu0 0
        %730 = vmatprep.mubr.bf16.mxu0 0
        %731 = vmatmul.mubr.bf16.gmra.mrb[0].mxu0 %v693
        %v732 = vpop.f32.mrb[0].mxu0
        %v733 = vadd.f32 0.0, %v732
        %v734 = vpop.f32.mrb[0].mxu0
        %v735 = vpop.f32.mrb[0].mxu0
        %v736 = vpop.f32.mrb[0].mxu0
        %737 = vdwg.mxu0
        %v738 = vsel %vm691, %v733, -inf
        %739 = vmax.xlane.f32.xlu0 %v738
        %v740 = vpop.xlane.xlu0 %739
        %v741 = vsub.f32 %v733, %v740
        %v742 = vmul.f32 %v741, 1.442695
        %v743 = vpow.pop %v742
        %v744 = vsel %vm691, %v743, 0.0
        %745 = vadd.xlane.f32.xlu0 %v744
        %v746 = vpop.xlane.xlu0 %745
        %v747 = vrcp.pop %v746
        %v748 = vmul.f32 %v743, %v747
        %v749 = vpack.c.bf16 %v748, %v748
        %v751 = vunpack.c.l.b16 %v690
        %v752 = vpack.c.b16 %v751, %v751
        %753 = vrot.lane.b32.xlu0 %v752, 96
        %v754 = vpop.permute.xlu0 %753
        %v756 = vsel %vm691, %v749, 0
        %vm758 = vcmask 1043456
        %v760 = vsel %vm758, %v754, 0
        %762 = vmatprep.subr.bf16.mxu0 0
        %763 = vmatpush1.bf16.msra.mxu0 %v760
        %764 = vmatprep.subr.bf16.mxu0 0
        %765 = vmatpush1.bf16.msra.mxu0 0
        %766 = vmatprep.subr.bf16.mxu0 0
        %767 = vmatpush1.bf16.msra.mxu0 0
        %768 = vmatprep.subr.bf16.mxu0 0
        %769 = vmatpush1.bf16.msra.mxu0 0
        %770 = vmatprep.subr.bf16.mxu0 0
        %771 = vmatpush1.bf16.msra.mxu0 0
        %772 = vmatprep.subr.bf16.mxu0 0
        %773 = vmatpush1.bf16.msra.mxu0 0
        %774 = vmatprep.subr.bf16.mxu0 0
        %775 = vmatpush1.bf16.msra.mxu0 0
        %776 = vmatprep.subr.bf16.mxu0 0
        %777 = vmatpush1.bf16.msra.mxu0 0
        %778 = vmatprep.subr.bf16.mxu0 0
        %779 = vmatpush1.bf16.msra.mxu0 0
        %780 = vmatprep.subr.bf16.mxu0 0
        %781 = vmatpush1.bf16.msra.mxu0 0
        %782 = vmatprep.subr.bf16.mxu0 0
        %783 = vmatpush1.bf16.msra.mxu0 0
        %784 = vmatprep.subr.bf16.mxu0 0
        %785 = vmatpush1.bf16.msra.mxu0 0
        %786 = vmatprep.subr.bf16.mxu0 0
        %787 = vmatpush1.bf16.msra.mxu0 0
        %788 = vmatprep.subr.bf16.mxu0 0
        %789 = vmatpush1.bf16.msra.mxu0 0
        %790 = vmatprep.subr.bf16.mxu0 0
        %791 = vmatpush1.bf16.msra.mxu0 0
        %792 = vmatprep.subr.bf16.mxu0 0
        %793 = vmatpush1.bf16.msra.mxu0 0
        %794 = vmatprep.mubr.bf16.mxu0 0
        %795 = vmatmul.mubr.bf16.gmra.mrb[0].mxu0 %v756
        %v796 = vpop.f32.mrb[0].mxu0
        %v797 = vadd.f32 0.0, %v796
        %v798 = vpop.f32.mrb[0].mxu0
        %v799 = vpop.f32.mrb[0].mxu0
        %v800 = vpop.f32.mrb[0].mxu0
        %801 = vdwg.mxu0
        %v802 = vpack.c.bf16 %v797, %v797
        %vm803 = vcmask 60416
        %804 = vst.msk [vmem:[#allocation4] sm:$0xf] %vm803, %v802
        %v805 = vld [vmem:[#allocation3] sm:$0xf]
        %807 = vrot.lane.b32.xlu0 %v689, 120
        %v808 = vpop.permute.xlu0 %807
        %v810 = vunpack.c.l.b16 %v805
        %v811 = vpack.c.b16 %v810, %v810
        %812 = vrot.lane.b32.xlu0 %v811, 120
        %v813 = vpop.permute.xlu0 %812
        %v815 = vsel %vm691, %v808, 0
        %v818 = vsel %vm691, %v813, 0
        %820 = vmatprep.subr.bf16.mxu0 0
        %821 = vmatpush1.bf16.xpose.msra.mxu0 %v818
        %822 = vmatprep.subr.bf16.mxu0 0
        %823 = vmatpush1.bf16.xpose.msra.mxu0 0
        %824 = vmatprep.subr.bf16.mxu0 0
        %825 = vmatpush1.bf16.xpose.msra.mxu0 0
        %826 = vmatprep.subr.bf16.mxu0 0
        %827 = vmatpush1.bf16.xpose.msra.mxu0 0
        %828 = vmatprep.subr.bf16.mxu0 0
        %829 = vmatpush1.bf16.xpose.msra.mxu0 0
        %830 = vmatprep.subr.bf16.mxu0 0
        %831 = vmatpush1.bf16.xpose.msra.mxu0 0
        %832 = vmatprep.subr.bf16.mxu0 0
        %833 = vmatpush1.bf16.xpose.msra.mxu0 0
        %834 = vmatprep.subr.bf16.mxu0 0
        %835 = vmatpush1.bf16.xpose.msra.mxu0 0
        %836 = vmatprep.subr.bf16.mxu0 0
        %837 = vmatpush1.bf16.xpose.msra.mxu0 0
        %838 = vmatprep.subr.bf16.mxu0 0
        %839 = vmatpush1.bf16.xpose.msra.mxu0 0
        %840 = vmatprep.subr.bf16.mxu0 0
        %841 = vmatpush1.bf16.xpose.msra.mxu0 0
        %842 = vmatprep.subr.bf16.mxu0 0
        %843 = vmatpush1.bf16.xpose.msra.mxu0 0
        %844 = vmatprep.subr.bf16.mxu0 0
        %845 = vmatpush1.bf16.xpose.msra.mxu0 0
        %846 = vmatprep.subr.bf16.mxu0 0
        %847 = vmatpush1.bf16.xpose.msra.mxu0 0
        %848 = vmatprep.subr.bf16.mxu0 0
        %849 = vmatpush1.bf16.xpose.msra.mxu0 0
        %850 = vmatprep.subr.bf16.mxu0 0
        %851 = vmatpush1.bf16.xpose.msra.mxu0 0
        %852 = vmatprep.mubr.bf16.mxu0 0
        %853 = vmatmul.mubr.bf16.gmra.mrb[0].mxu0 %v815
        %v854 = vpop.f32.mrb[0].mxu0
        %v855 = vadd.f32 0.0, %v854
        %v856 = vpop.f32.mrb[0].mxu0
        %v857 = vpop.f32.mrb[0].mxu0
        %v858 = vpop.f32.mrb[0].mxu0
        %859 = vdwg.mxu0
        %v860 = vsel %vm691, %v855, -inf
        %861 = vmax.xlane.f32.xlu0 %v860
        %v862 = vpop.xlane.xlu0 %861
        %v863 = vsub.f32 %v855, %v862
        %v864 = vmul.f32 %v863, 1.442695
        %v865 = vpow.pop %v864
        %v866 = vsel %vm691, %v865, 0.0
        %867 = vadd.xlane.f32.xlu0 %v866
        %v868 = vpop.xlane.xlu0 %867
        %v869 = vrcp.pop %v868
        %v870 = vmul.f32 %v865, %v869
        %v871 = vpack.c.bf16 %v870, %v870
        %872 = vrot.lane.b32.xlu0 %v811, 88
        %v873 = vpop.permute.xlu0 %872
        %v875 = vsel %vm691, %v871, 0
        %v878 = vsel %vm758, %v873, 0
        %880 = vmatprep.subr.bf16.mxu0 0
        %881 = vmatpush1.bf16.msra.mxu0 %v878
        %882 = vmatprep.subr.bf16.mxu0 0
        %883 = vmatpush1.bf16.msra.mxu0 0
        %884 = vmatprep.subr.bf16.mxu0 0
        %885 = vmatpush1.bf16.msra.mxu0 0
        %886 = vmatprep.subr.bf16.mxu0 0
        %887 = vmatpush1.bf16.msra.mxu0 0
        %888 = vmatprep.subr.bf16.mxu0 0
        %889 = vmatpush1.bf16.msra.mxu0 0
        %890 = vmatprep.subr.bf16.mxu0 0
        %891 = vmatpush1.bf16.msra.mxu0 0
        %892 = vmatprep.subr.bf16.mxu0 0
        %893 = vmatpush1.bf16.msra.mxu0 0
        %894 = vmatprep.subr.bf16.mxu0 0
        %895 = vmatpush1.bf16.msra.mxu0 0
        %896 = vmatprep.subr.bf16.mxu0 0
        %897 = vmatpush1.bf16.msra.mxu0 0
        %898 = vmatprep.subr.bf16.mxu0 0
        %899 = vmatpush1.bf16.msra.mxu0 0
        %900 = vmatprep.subr.bf16.mxu0 0
        %901 = vmatpush1.bf16.msra.mxu0 0
        %902 = vmatprep.subr.bf16.mxu0 0
        %903 = vmatpush1.bf16.msra.mxu0 0
        %904 = vmatprep.subr.bf16.mxu0 0
        %905 = vmatpush1.bf16.msra.mxu0 0
        %906 = vmatprep.subr.bf16.mxu0 0
        %907 = vmatpush1.bf16.msra.mxu0 0
        %908 = vmatprep.subr.bf16.mxu0 0
        %909 = vmatpush1.bf16.msra.mxu0 0
        %910 = vmatprep.subr.bf16.mxu0 0
        %911 = vmatpush1.bf16.msra.mxu0 0
        %912 = vmatprep.mubr.bf16.mxu0 0
        %913 = vmatmul.mubr.bf16.gmra.mrb[0].mxu0 %v875
        %v914 = vpop.f32.mrb[0].mxu0
        %v915 = vadd.f32 0.0, %v914
        %v916 = vpop.f32.mrb[0].mxu0
        %v917 = vpop.f32.mrb[0].mxu0
        %v918 = vpop.f32.mrb[0].mxu0
        %919 = vdwg.mxu0
        %v920 = vpack.c.bf16 %v915, %v915
        %v922 = vunpack.c.l.b16 %v920
        %v923 = vpack.c.b16 %v922, %v922
        %924 = vrot.lane.b32.xlu0 %v923, 8
        %v925 = vpop.permute.xlu0 %924
        %vm927 = vcmask 126016
        %928 = vst.msk [vmem:[#allocation4] sm:$0xf] %vm927, %v925
        %v929 = vld [vmem:[#allocation3] sm:$0xf]
        %930 = vrot.lane.b32.xlu0 %v689, 112
        %v931 = vpop.permute.xlu0 %930
        %v933 = vunpack.c.l.b16 %v929
        %v934 = vpack.c.b16 %v933, %v933
        %935 = vrot.lane.b32.xlu0 %v934, 112
        %v936 = vpop.permute.xlu0 %935
        %v938 = vsel %vm691, %v931, 0
        %v941 = vsel %vm691, %v936, 0
        %943 = vmatprep.subr.bf16.mxu0 0
        %944 = vmatpush1.bf16.xpose.msra.mxu0 %v941
        %945 = vmatprep.subr.bf16.mxu0 0
        %946 = vmatpush1.bf16.xpose.msra.mxu0 0
        %947 = vmatprep.subr.bf16.mxu0 0
        %948 = vmatpush1.bf16.xpose.msra.mxu0 0
        %949 = vmatprep.subr.bf16.mxu0 0
        %950 = vmatpush1.bf16.xpose.msra.mxu0 0
        %951 = vmatprep.subr.bf16.mxu0 0
        %952 = vmatpush1.bf16.xpose.msra.mxu0 0
        %953 = vmatprep.subr.bf16.mxu0 0
        %954 = vmatpush1.bf16.xpose.msra.mxu0 0
        %955 = vmatprep.subr.bf16.mxu0 0
        %956 = vmatpush1.bf16.xpose.msra.mxu0 0
        %957 = vmatprep.subr.bf16.mxu0 0
        %958 = vmatpush1.bf16.xpose.msra.mxu0 0
        %959 = vmatprep.subr.bf16.mxu0 0
        %960 = vmatpush1.bf16.xpose.msra.mxu0 0
        %961 = vmatprep.subr.bf16.mxu0 0
        %962 = vmatpush1.bf16.xpose.msra.mxu0 0
        %963 = vmatprep.subr.bf16.mxu0 0
        %964 = vmatpush1.bf16.xpose.msra.mxu0 0
        %965 = vmatprep.subr.bf16.mxu0 0
        %966 = vmatpush1.bf16.xpose.msra.mxu0 0
        %967 = vmatprep.subr.bf16.mxu0 0
        %968 = vmatpush1.bf16.xpose.msra.mxu0 0
        %969 = vmatprep.subr.bf16.mxu0 0
        %970 = vmatpush1.bf16.xpose.msra.mxu0 0
        %971 = vmatprep.subr.bf16.mxu0 0
        %972 = vmatpush1.bf16.xpose.msra.mxu0 0
        %973 = vmatprep.subr.bf16.mxu0 0
        %974 = vmatpush1.bf16.xpose.msra.mxu0 0
        %975 = vmatprep.mubr.bf16.mxu0 0
        %976 = vmatmul.mubr.bf16.gmra.mrb[0].mxu0 %v938
        %v977 = vpop.f32.mrb[0].mxu0
        %v978 = vadd.f32 0.0, %v977
        %v979 = vpop.f32.mrb[0].mxu0
        %v980 = vpop.f32.mrb[0].mxu0
        %v981 = vpop.f32.mrb[0].mxu0
        %982 = vdwg.mxu0
        %v983 = vsel %vm691, %v978, -inf
        %984 = vmax.xlane.f32.xlu0 %v983
        %v985 = vpop.xlane.xlu0 %984
        %v986 = vsub.f32 %v978, %v985
        %v987 = vmul.f32 %v986, 1.442695
        %v988 = vpow.pop %v987
        %v989 = vsel %vm691, %v988, 0.0
        %990 = vadd.xlane.f32.xlu0 %v989
        %v991 = vpop.xlane.xlu0 %990
        %v992 = vrcp.pop %v991
        %v993 = vmul.f32 %v988, %v992
        %v994 = vpack.c.bf16 %v993, %v993
        %995 = vrot.lane.b32.xlu0 %v934, 80
        %v996 = vpop.permute.xlu0 %995
        %v998 = vsel %vm691, %v994, 0
        %v1001 = vsel %vm758, %v996, 0
        %1003 = vmatprep.subr.bf16.mxu0 0
        %1004 = vmatpush1.bf16.msra.mxu0 %v1001
        %1005 = vmatprep.subr.bf16.mxu0 0
        %1006 = vmatpush1.bf16.msra.mxu0 0
        %1007 = vmatprep.subr.bf16.mxu0 0
        %1008 = vmatpush1.bf16.msra.mxu0 0
        %1009 = vmatprep.subr.bf16.mxu0 0
        %1010 = vmatpush1.bf16.msra.mxu0 0
        %1011 = vmatprep.subr.bf16.mxu0 0
        %1012 = vmatpush1.bf16.msra.mxu0 0
        %1013 = vmatprep.subr.bf16.mxu0 0
        %1014 = vmatpush1.bf16.msra.mxu0 0
        %1015 = vmatprep.subr.bf16.mxu0 0
        %1016 = vmatpush1.bf16.msra.mxu0 0
        %1017 = vmatprep.subr.bf16.mxu0 0
        %1018 = vmatpush1.bf16.msra.mxu0 0
        %1019 = vmatprep.subr.bf16.mxu0 0
        %1020 = vmatpush1.bf16.msra.mxu0 0
        %1021 = vmatprep.subr.bf16.mxu0 0
        %1022 = vmatpush1.bf16.msra.mxu0 0
        %1023 = vmatprep.subr.bf16.mxu0 0
        %1024 = vmatpush1.bf16.msra.mxu0 0
        %1025 = vmatprep.subr.bf16.mxu0 0
        %1026 = vmatpush1.bf16.msra.mxu0 0
        %1027 = vmatprep.subr.bf16.mxu0 0
        %1028 = vmatpush1.bf16.msra.mxu0 0
        %1029 = vmatprep.subr.bf16.mxu0 0
        %1030 = vmatpush1.bf16.msra.mxu0 0
        %1031 = vmatprep.subr.bf16.mxu0 0
        %1032 = vmatpush1.bf16.msra.mxu0 0
        %1033 = vmatprep.subr.bf16.mxu0 0
        %1034 = vmatpush1.bf16.msra.mxu0 0
        %1035 = vmatprep.mubr.bf16.mxu0 0
        %1036 = vmatmul.mubr.bf16.gmra.mrb[0].mxu0 %v998
        %v1037 = vpop.f32.mrb[0].mxu0
        %v1038 = vadd.f32 0.0, %v1037
        %v1039 = vpop.f32.mrb[0].mxu0
        %v1040 = vpop.f32.mrb[0].mxu0
        %v1041 = vpop.f32.mrb[0].mxu0
        %1042 = vdwg.mxu0
        %v1043 = vpack.c.bf16 %v1038, %v1038
        %v1045 = vunpack.c.l.b16 %v1043
        %v1046 = vpack.c.b16 %v1045, %v1045
        %1047 = vrot.lane.b32.xlu0 %v1046, 16
        %v1048 = vpop.permute.xlu0 %1047
        %vm1050 = vcmask 191616
        %1051 = vst.msk [vmem:[#allocation4] sm:$0xf] %vm1050, %v1048
        %v1052 = vld [vmem:[#allocation3] sm:$0xf]
        %1053 = vrot.lane.b32.xlu0 %v689, 104
        %v1054 = vpop.permute.xlu0 %1053
        %v1056 = vunpack.c.l.b16 %v1052
        %v1057 = vpack.c.b16 %v1056, %v1056
        %1058 = vrot.lane.b32.xlu0 %v1057, 104
        %v1059 = vpop.permute.xlu0 %1058
        %v1061 = vsel %vm691, %v1054, 0
        %v1064 = vsel %vm691, %v1059, 0
        %1066 = vmatprep.subr.bf16.mxu0 0
        %1067 = vmatpush1.bf16.xpose.msra.mxu0 %v1064
        %1068 = vmatprep.subr.bf16.mxu0 0
        %1069 = vmatpush1.bf16.xpose.msra.mxu0 0
        %1070 = vmatprep.subr.bf16.mxu0 0
        %1071 = vmatpush1.bf16.xpose.msra.mxu0 0
        %1072 = vmatprep.subr.bf16.mxu0 0
        %1073 = vmatpush1.bf16.xpose.msra.mxu0 0
        %1074 = vmatprep.subr.bf16.mxu0 0
        %1075 = vmatpush1.bf16.xpose.msra.mxu0 0
        %1076 = vmatprep.subr.bf16.mxu0 0
        %1077 = vmatpush1.bf16.xpose.msra.mxu0 0
        %1078 = vmatprep.subr.bf16.mxu0 0
        %1079 = vmatpush1.bf16.xpose.msra.mxu0 0
        %1080 = vmatprep.subr.bf16.mxu0 0
        %1081 = vmatpush1.bf16.xpose.msra.mxu0 0
        %1082 = vmatprep.subr.bf16.mxu0 0
        %1083 = vmatpush1.bf16.xpose.msra.mxu0 0
        %1084 = vmatprep.subr.bf16.mxu0 0
        %1085 = vmatpush1.bf16.xpose.msra.mxu0 0
        %1086 = vmatprep.subr.bf16.mxu0 0
        %1087 = vmatpush1.bf16.xpose.msra.mxu0 0
        %1088 = vmatprep.subr.bf16.mxu0 0
        %1089 = vmatpush1.bf16.xpose.msra.mxu0 0
        %1090 = vmatprep.subr.bf16.mxu0 0
        %1091 = vmatpush1.bf16.xpose.msra.mxu0 0
        %1092 = vmatprep.subr.bf16.mxu0 0
        %1093 = vmatpush1.bf16.xpose.msra.mxu0 0
        %1094 = vmatprep.subr.bf16.mxu0 0
        %1095 = vmatpush1.bf16.xpose.msra.mxu0 0
        %1096 = vmatprep.subr.bf16.mxu0 0
        %1097 = vmatpush1.bf16.xpose.msra.mxu0 0
        %1098 = vmatprep.mubr.bf16.mxu0 0
        %1099 = vmatmul.mubr.bf16.gmra.mrb[0].mxu0 %v1061
        %v1100 = vpop.f32.mrb[0].mxu0
        %v1101 = vadd.f32 0.0, %v1100
        %v1102 = vpop.f32.mrb[0].mxu0
        %v1103 = vpop.f32.mrb[0].mxu0
        %v1104 = vpop.f32.mrb[0].mxu0
        %1105 = vdwg.mxu0
        %v1106 = vsel %vm691, %v1101, -inf
        %1107 = vmax.xlane.f32.xlu0 %v1106
        %v1108 = vpop.xlane.xlu0 %1107
        %v1109 = vsub.f32 %v1101, %v1108
        %v1110 = vmul.f32 %v1109, 1.442695
        %v1111 = vpow.pop %v1110
        %v1112 = vsel %vm691, %v1111, 0.0
        %1113 = vadd.xlane.f32.xlu0 %v1112
        %v1114 = vpop.xlane.xlu0 %1113
        %v1115 = vrcp.pop %v1114
        %v1116 = vmul.f32 %v1111, %v1115
        %v1117 = vpack.c.bf16 %v1116, %v1116
        %1118 = vrot.lane.b32.xlu0 %v1057, 72
        %v1119 = vpop.permute.xlu0 %1118
        %v1121 = vsel %vm691, %v1117, 0
        %v1124 = vsel %vm758, %v1119, 0
        %1126 = vmatprep.subr.bf16.mxu0 0
        %1127 = vmatpush1.bf16.msra.mxu0 %v1124
        %1128 = vmatprep.subr.bf16.mxu0 0
        %1129 = vmatpush1.bf16.msra.mxu0 0
        %1130 = vmatprep.subr.bf16.mxu0 0
        %1131 = vmatpush1.bf16.msra.mxu0 0
        %1132 = vmatprep.subr.bf16.mxu0 0
        %1133 = vmatpush1.bf16.msra.mxu0 0
        %1134 = vmatprep.subr.bf16.mxu0 0
        %1135 = vmatpush1.bf16.msra.mxu0 0
        %1136 = vmatprep.subr.bf16.mxu0 0
        %1137 = vmatpush1.bf16.msra.mxu0 0
        %1138 = vmatprep.subr.bf16.mxu0 0
        %1139 = vmatpush1.bf16.msra.mxu0 0
        %1140 = vmatprep.subr.bf16.mxu0 0
        %1141 = vmatpush1.bf16.msra.mxu0 0
        %1142 = vmatprep.subr.bf16.mxu0 0
        %1143 = vmatpush1.bf16.msra.mxu0 0
        %1144 = vmatprep.subr.bf16.mxu0 0
        %1145 = vmatpush1.bf16.msra.mxu0 0
        %1146 = vmatprep.subr.bf16.mxu0 0
        %1147 = vmatpush1.bf16.msra.mxu0 0
        %1148 = vmatprep.subr.bf16.mxu0 0
        %1149 = vmatpush1.bf16.msra.mxu0 0
        %1150 = vmatprep.subr.bf16.mxu0 0
        %1151 = vmatpush1.bf16.msra.mxu0 0
        %1152 = vmatprep.subr.bf16.mxu0 0
        %1153 = vmatpush1.bf16.msra.mxu0 0
        %1154 = vmatprep.subr.bf16.mxu0 0
        %1155 = vmatpush1.bf16.msra.mxu0 0
        %1156 = vmatprep.subr.bf16.mxu0 0
        %1157 = vmatpush1.bf16.msra.mxu0 0
        %1158 = vmatprep.mubr.bf16.mxu0 0
        %1159 = vmatmul.mubr.bf16.gmra.mrb[0].mxu0 %v1121
        %v1160 = vpop.f32.mrb[0].mxu0
        %v1161 = vadd.f32 0.0, %v1160
        %v1162 = vpop.f32.mrb[0].mxu0
        %v1163 = vpop.f32.mrb[0].mxu0
        %v1164 = vpop.f32.mrb[0].mxu0
        %1165 = vdwg.mxu0
        %v1166 = vpack.c.bf16 %v1161, %v1161
        %v1168 = vunpack.c.l.b16 %v1166
        %v1169 = vpack.c.b16 %v1168, %v1168
        %1170 = vrot.lane.b32.xlu0 %v1169, 24
        %v1171 = vpop.permute.xlu0 %1170
        %vm1173 = vcmask 257216
        %1174 = vst.msk [vmem:[#allocation4] sm:$0xf] %vm1173, %v1171
        %v1175 = vld [vmem:[#allocation4] sm:$0xf]
        %v1176 = vld [vmem:[%s7] sm:$0xf]
        %v1177 = vld [vmem:[%s7 + $0x4] sm:$0xf]
        %v1178 = vld [vmem:[%s7 + $0x8] sm:$0xf]
        %v1179 = vld [vmem:[%s7 + $0xc] sm:$0xf]
        %v1180 = vld [vmem:[%s8] sm:$0x1]
        %v1182 = vlaneseq
        %v1183 = vshrl.u32 %v1182, 7
        %v1184 = vsub.s32 0, %v1183
        %v1185 = vrot.slane %v1180, %v1184
        %v1191 = vunpack.c.l.b16 %v1176
        %v1192 = vunpack.c.l.b16 %v1177
        %v1193 = vunpack.c.l.b16 %v1178
        %v1194 = vunpack.c.l.b16 %v1179
        %v1195 = vpack.c.b16 %v1192, %v1191
        %v1196 = vpack.c.b16 %v1194, %v1193
        %v1200 = vsel %vm644, %v1175, 0
        %1202 = vmatprep.subr.bf16.mxu0 0
        %1203 = vmatpush1.bf16.msra.mxu0 %v1195
        %1204 = vmatprep.subr.bf16.mxu0 0
        %1205 = vmatpush1.bf16.msra.mxu0 %v1196
        %1206 = vmatprep.subr.bf16.mxu0 0
        %1207 = vmatpush1.bf16.msra.mxu0 0
        %1208 = vmatprep.subr.bf16.mxu0 0
        %1209 = vmatpush1.bf16.msra.mxu0 0
        %1210 = vmatprep.subr.bf16.mxu0 0
        %1211 = vmatpush1.bf16.msra.mxu0 0
        %1212 = vmatprep.subr.bf16.mxu0 0
        %1213 = vmatpush1.bf16.msra.mxu0 0
        %1214 = vmatprep.subr.bf16.mxu0 0
        %1215 = vmatpush1.bf16.msra.mxu0 0
        %1216 = vmatprep.subr.bf16.mxu0 0
        %1217 = vmatpush1.bf16.msra.mxu0 0
        %1218 = vmatprep.subr.bf16.mxu0 0
        %1219 = vmatpush1.bf16.msra.mxu0 0
        %1220 = vmatprep.subr.bf16.mxu0 0
        %1221 = vmatpush1.bf16.msra.mxu0 0
        %1222 = vmatprep.subr.bf16.mxu0 0
        %1223 = vmatpush1.bf16.msra.mxu0 0
        %1224 = vmatprep.subr.bf16.mxu0 0
        %1225 = vmatpush1.bf16.msra.mxu0 0
        %1226 = vmatprep.subr.bf16.mxu0 0
        %1227 = vmatpush1.bf16.msra.mxu0 0
        %1228 = vmatprep.subr.bf16.mxu0 0
        %1229 = vmatpush1.bf16.msra.mxu0 0
        %1230 = vmatprep.subr.bf16.mxu0 0
        %1231 = vmatpush1.bf16.msra.mxu0 0
        %1232 = vmatprep.subr.bf16.mxu0 0
        %1233 = vmatpush1.bf16.msra.mxu0 0
        %1234 = vmatprep.mubr.bf16.mxu0 0
        %1235 = vmatmul.mubr.bf16.gmra.mrb[0].mxu0 %v1200
        %v1236 = vpop.f32.mrb[0].mxu0
        %v1237 = vadd.f32 %v1185, %v1236
        %v1238 = vpop.f32.mrb[0].mxu0
        %v1239 = vpop.f32.mrb[0].mxu0
        %v1240 = vpop.f32.mrb[0].mxu0
        %1241 = vdwg.mxu0
        %v1242 = vadd.f32 %v615, %v1237
        %v1243 = vld [vmem:[%s9] sm:$0x1]
        %v1244 = vld [vmem:[%s10] sm:$0x1]
        %v1245 = vsel %vm644, %v1242, 0.0
        %1246 = vadd.xlane.f32.xlu0 %v1245
        %v1247 = vpop.xlane.xlu0 %1246
        %v1248 = vrcp.pop 32.0
        %v1249 = vmul.f32 %v1247, %v1248
        %v1250 = vsub.f32 %v1242, %v1249
        %v1251 = vmul.f32 %v1250, %v1250
        %v1252 = vsel %vm644, %v1251, 0.0
        %1253 = vadd.xlane.f32.xlu0 %v1252
        %v1254 = vpop.xlane.xlu0 %1253
        %v1255 = vmul.f32 %v1254, %v1248
        %v1256 = vadd.f32 %v1255, 1e-05
        %v1257 = vrsqrt.pop %v1256
        %v1258 = vmul.f32 %v1250, %v1257
        %v1260 = vlaneseq
        %v1261 = vshrl.u32 %v1260, 7
        %v1262 = vsub.s32 0, %v1261
        %v1263 = vrot.slane %v1243, %v1262
        %v1265 = vmul.f32 %v1258, %v1263
        %v1267 = vlaneseq
        %v1268 = vshrl.u32 %v1267, 7
        %v1269 = vsub.s32 0, %v1268
        %v1270 = vrot.slane %v1244, %v1269
        %v1272 = vadd.f32 %v1265, %v1270
        %v1273 = vpack.c.bf16 %v1272, %v1272
        %v1274 = vld [vmem:[%s11] sm:$0xf]
        %v1275 = vld [vmem:[%s11 + $0x4] sm:$0xf]
        %v1276 = vld [vmem:[%s11 + $0x8] sm:$0xf]
        %v1277 = vld [vmem:[%s11 + $0xc] sm:$0xf]
        %v1278 = vld [vmem:[%s12] sm:$0x1]
        %v1280 = vlaneseq
        %v1281 = vshrl.u32 %v1280, 7
        %v1282 = vsub.s32 0, %v1281
        %v1283 = vrot.slane %v1278, %v1282
        %v1289 = vunpack.c.l.b16 %v1274
        %v1290 = vunpack.c.l.b16 %v1275
        %v1291 = vunpack.c.l.b16 %v1276
        %v1292 = vunpack.c.l.b16 %v1277
        %v1293 = vpack.c.b16 %v1290, %v1289
        %v1294 = vpack.c.b16 %v1292, %v1291
        %v1298 = vsel %vm644, %v1273, 0
        %1300 = vmatprep.subr.bf16.mxu0 0
        %1301 = vmatpush1.bf16.msra.mxu0 %v1293
        %1302 = vmatprep.subr.bf16.mxu0 0
        %1303 = vmatpush1.bf16.msra.mxu0 %v1294
        %1304 = vmatprep.subr.bf16.mxu0 0
        %1305 = vmatpush1.bf16.msra.mxu0 0
        %1306 = vmatprep.subr.bf16.mxu0 0
        %1307 = vmatpush1.bf16.msra.mxu0 0
        %1308 = vmatprep.subr.bf16.mxu0 0
        %1309 = vmatpush1.bf16.msra.mxu0 0
        %1310 = vmatprep.subr.bf16.mxu0 0
        %1311 = vmatpush1.bf16.msra.mxu0 0
        %1312 = vmatprep.subr.bf16.mxu0 0
        %1313 = vmatpush1.bf16.msra.mxu0 0
        %1314 = vmatprep.subr.bf16.mxu0 0
        %1315 = vmatpush1.bf16.msra.mxu0 0
        %1316 = vmatprep.subr.bf16.mxu0 0
        %1317 = vmatpush1.bf16.msra.mxu0 0
        %1318 = vmatprep.subr.bf16.mxu0 0
        %1319 = vmatpush1.bf16.msra.mxu0 0
        %1320 = vmatprep.subr.bf16.mxu0 0
        %1321 = vmatpush1.bf16.msra.mxu0 0
        %1322 = vmatprep.subr.bf16.mxu0 0
        %1323 = vmatpush1.bf16.msra.mxu0 0
        %1324 = vmatprep.subr.bf16.mxu0 0
        %1325 = vmatpush1.bf16.msra.mxu0 0
        %1326 = vmatprep.subr.bf16.mxu0 0
        %1327 = vmatpush1.bf16.msra.mxu0 0
        %1328 = vmatprep.subr.bf16.mxu0 0
        %1329 = vmatpush1.bf16.msra.mxu0 0
        %1330 = vmatprep.subr.bf16.mxu0 0
        %1331 = vmatpush1.bf16.msra.mxu0 0
        %1332 = vmatprep.mubr.bf16.mxu0 0
        %1333 = vmatmul.mubr.bf16.gmra.mrb[0].mxu0 %v1298
        %v1334 = vpop.f32.mrb[0].mxu0
        %v1335 = vadd.f32 %v1283, %v1334
        %v1336 = vpop.f32.mrb[0].mxu0
        %v1337 = vpop.f32.mrb[0].mxu0
        %v1338 = vpop.f32.mrb[0].mxu0
        %1339 = vdwg.mxu0
        %v1340 = vmax.f32 %v1335, 0.0
        %v1341 = vpack.c.bf16 %v1340, %v1340
        %v1342 = vld [vmem:[%s13] sm:$0xf]
        %v1343 = vld [vmem:[%s13 + $0x4] sm:$0xf]
        %v1344 = vld [vmem:[%s13 + $0x8] sm:$0xf]
        %v1345 = vld [vmem:[%s13 + $0xc] sm:$0xf]
        %v1346 = vld [vmem:[%s13 + $0x10] sm:$0xf]
        %v1347 = vld [vmem:[%s13 + $0x14] sm:$0xf]
        %v1348 = vld [vmem:[%s13 + $0x18] sm:$0xf]
        %v1349 = vld [vmem:[%s13 + $0x1c] sm:$0xf]
        %v1350 = vld [vmem:[%s13 + $0x20] sm:$0xf]
        %v1351 = vld [vmem:[%s13 + $0x24] sm:$0xf]
        %v1352 = vld [vmem:[%s13 + $0x28] sm:$0xf]
        %v1353 = vld [vmem:[%s13 + $0x2c] sm:$0xf]
        %v1354 = vld [vmem:[%s13 + $0x30] sm:$0xf]
        %v1355 = vld [vmem:[%s13 + $0x34] sm:$0xf]
        %v1356 = vld [vmem:[%s13 + $0x38] sm:$0xf]
        %v1357 = vld [vmem:[%s13 + $0x3c] sm:$0xf]
        %v1358 = vld [vmem:[%s14] sm:$0x1]
        %v1360 = vlaneseq
        %v1361 = vshrl.u32 %v1360, 7
        %v1362 = vsub.s32 0, %v1361
        %v1363 = vrot.slane %v1358, %v1362
        %v1381 = vunpack.c.l.b16 %v1342
        %v1382 = vunpack.c.l.b16 %v1343
        %v1383 = vunpack.c.l.b16 %v1344
        %v1384 = vunpack.c.l.b16 %v1345
        %v1385 = vunpack.c.l.b16 %v1346
        %v1386 = vunpack.c.l.b16 %v1347
        %v1387 = vunpack.c.l.b16 %v1348
        %v1388 = vunpack.c.l.b16 %v1349
        %v1389 = vunpack.c.l.b16 %v1350
        %v1390 = vunpack.c.l.b16 %v1351
        %v1391 = vunpack.c.l.b16 %v1352
        %v1392 = vunpack.c.l.b16 %v1353
        %v1393 = vunpack.c.l.b16 %v1354
        %v1394 = vunpack.c.l.b16 %v1355
        %v1395 = vunpack.c.l.b16 %v1356
        %v1396 = vunpack.c.l.b16 %v1357
        %v1397 = vpack.c.b16 %v1382, %v1381
        %v1398 = vpack.c.b16 %v1384, %v1383
        %v1399 = vpack.c.b16 %v1386, %v1385
        %v1400 = vpack.c.b16 %v1388, %v1387
        %v1401 = vpack.c.b16 %v1390, %v1389
        %v1402 = vpack.c.b16 %v1392, %v1391
        %v1403 = vpack.c.b16 %v1394, %v1393
        %v1404 = vpack.c.b16 %v1396, %v1395
        %1413 = vmatprep.subr.bf16.mxu0 0
        %1414 = vmatpush1.bf16.msra.mxu0 %v1397
        %1415 = vmatprep.subr.bf16.mxu0 0
        %1416 = vmatpush1.bf16.msra.mxu0 %v1398
        %1417 = vmatprep.subr.bf16.mxu0 0
        %1418 = vmatpush1.bf16.msra.mxu0 %v1399
        %1419 = vmatprep.subr.bf16.mxu0 0
        %1420 = vmatpush1.bf16.msra.mxu0 %v1400
        %1421 = vmatprep.subr.bf16.mxu0 0
        %1422 = vmatpush1.bf16.msra.mxu0 %v1401
        %1423 = vmatprep.subr.bf16.mxu0 0
        %1424 = vmatpush1.bf16.msra.mxu0 %v1402
        %1425 = vmatprep.subr.bf16.mxu0 0
        %1426 = vmatpush1.bf16.msra.mxu0 %v1403
        %1427 = vmatprep.subr.bf16.mxu0 0
        %1428 = vmatpush1.bf16.msra.mxu0 %v1404
        %1429 = vmatprep.subr.bf16.mxu0 0
        %1430 = vmatpush1.bf16.msra.mxu0 0
        %1431 = vmatprep.subr.bf16.mxu0 0
        %1432 = vmatpush1.bf16.msra.mxu0 0
        %1433 = vmatprep.subr.bf16.mxu0 0
        %1434 = vmatpush1.bf16.msra.mxu0 0
        %1435 = vmatprep.subr.bf16.mxu0 0
        %1436 = vmatpush1.bf16.msra.mxu0 0
        %1437 = vmatprep.subr.bf16.mxu0 0
        %1438 = vmatpush1.bf16.msra.mxu0 0
        %1439 = vmatprep.subr.bf16.mxu0 0
        %1440 = vmatpush1.bf16.msra.mxu0 0
        %1441 = vmatprep.subr.bf16.mxu0 0
        %1442 = vmatpush1.bf16.msra.mxu0 0
        %1443 = vmatprep.subr.bf16.mxu0 0
        %1444 = vmatpush1.bf16.msra.mxu0 0
        %1445 = vmatprep.mubr.bf16.mxu0 0
        %1446 = vmatmul.mubr.bf16.gmra.mrb[0].mxu0 %v1341
        %v1447 = vpop.f32.mrb[0].mxu0
        %v1448 = vadd.f32 %v1363, %v1447
        %v1449 = vpop.f32.mrb[0].mxu0
        %v1450 = vpop.f32.mrb[0].mxu0
        %v1451 = vpop.f32.mrb[0].mxu0
        %1452 = vdwg.mxu0
        %v1453 = vadd.f32 %v1242, %v1448
        %1454 = vst.msk [vmem:[%s499] sm:$0xff] %vm644, %v1453
        %s1455 = sand.u32 %s371, 1
        %s1456 = scalar_lea.sflag [#allocation6], %s1455
        %s1457 = sand.u32 %s371, 1
        %s1458 = smul.addr %s1457, 8
        %s1459 = scalar_lea.vmem [#allocation5], %s1458
        // Predicated region
        $region85: #{tpu_custom_call.1} parent=79 // pred_check
          %p1460 = pneg %p381
        $region86: #{tpu_custom_call.1} parent=79 // pred_check_branch
          %1462 = sbr.rel (%p1460) target = $region88
        $region87: #{tpu_custom_call.1} parent=79 // pred_region
          %s1464 = ssub.s32 128, 128
          %1465 = vsyncadd %s1456, %s1464
          %s1466 = sadd.s32 %s34, %s33
          %s1467 = smul.addr %s1466, 128
          %s1468 = scalar_lea.hbm %s15, %s1467
          %s1470 = sshll.u32 %s1459, 4
          %s1471 = int_to_ptr.vmem [resolvable:$true] %s1470
          %1473 = dma.vmem_to_hbm [thread:$0]  %s1471, 128, %s1468, %s1456
        $region88: #{tpu_custom_call.1} parent=79 // pred_fallthru
          _
      $region80: #{tpu_custom_call.1} parent=5 // pred_fallthru
        _
      %p1474 = scmp.le.s32.totalorder 2, %s24
      // Predicated region
      $region89: #{tpu_custom_call.1} parent=5 // pred_check
        %p1475 = pneg %p1474
      $region90: #{tpu_custom_call.1} parent=5 // pred_check_branch
        %1477 = sbr.rel (%p1475) target = $region92
      $region91: #{tpu_custom_call.1} parent=5 // pred_region
        %s1478 = ssub.s32 %s24, 2
        // Predicated region
        $region93: #{tpu_custom_call.1} parent=91 // pred_check
          %p1479 = pneg %p387
        $region94: #{tpu_custom_call.1} parent=91 // pred_check_branch
          %1481 = sbr.rel (%p1479) target = $region96
        $region95: #{tpu_custom_call.1} parent=91 // pred_region
          %s1482 = sand.u32 %s372, 1
          %s1483 = scalar_lea.sflag [#allocation6], %s1482
          %s1484 = sand.u32 %s372, 1
          %s1485 = smul.addr %s1484, 8
          %s1486 = scalar_lea.vmem [#allocation5], %s1485
          %1487 = dma.done %s1483, 128
        $region96: #{tpu_custom_call.1} parent=91 // pred_fallthru
          _
      $region92: #{tpu_custom_call.1} parent=5 // pred_fallthru
        _
    $region6: #{tpu_custom_call.1} parent=1 // loop_footer
      %s28 = sadd.s32 1, %s24
    $region7: #{tpu_custom_call.1} parent=1 // loop_footer_branch
      %23 = sbr.rel target = $region3
    $region8: #{tpu_custom_call.1} parent=1 // loop_exit
      _
    %1488 = vsyncpa [#allocation6], 1
    %s1489 = scalar_lea.sflag [#allocation6], 1
    %1490 = vsyncpa %s1489, 1

</llo_original>
